<compile_context>
chip_gen: v6e
topology: v6e:2x2x1
jax: 0.10.0
libtpu: 0.0.40
codegen_flags: <defaults>
</compile_context>

<pallas_src>
import functools

import jax
import jax.numpy as jnp
from jax import lax
from jax.experimental import pallas as pl
from jax.experimental.pallas import tpu as pltpu

N_CLASSES = 9
BN_EPS = 1e-5
LEAKY_SLOPE = 0.1
_VMEM_LIMIT = 48 * 1024 * 1024   # <= v7x's 64 MiB/TC physical; ample on v5e/v6e


# ----------------------------- small helpers ------------------------------ #

def _round_up(x, m):
    return (x + m - 1) // m * m


def _pick_tile(total, candidates):
    for c in candidates:
        if c <= total and total % c == 0:
            return c
    return total


# --------------------------- weight / param packing ------------------------ #

def pack_conv_weight(weight):
    """(Cout, Cin, K, K) f32 -> (KKC_pad, Cout_pad) bf16, rows ordered (ky,kx,Cin).

    Done once at init so the steady-state forward never re-transposes / re-pads /
    re-casts weights.
    """
    cout, cin, k, _ = weight.shape
    kkc = k * k * cin
    kkc_pad = _round_up(kkc, 128)
    cout_pad = _round_up(cout, 128)
    w2 = weight.transpose(2, 3, 1, 0).reshape(kkc, cout).astype(jnp.bfloat16)
    return jnp.pad(w2, ((0, kkc_pad - kkc), (0, cout_pad - cout)))


def _pad_vec(v, n_pad):
    return jnp.zeros((n_pad,), jnp.float32).at[:v.shape[0]].set(v)


def _im2col_nhwc(x, ksize, padding, dilation):
    """stride-1 im2col over channels-last bf16 activations.

    Rows ordered (N, Ho, Wo); columns ordered (ky, kx, Cin) to match
    pack_conv_weight. A 1x1 conv is a pure reshape (no copy).
    """
    # TODO(synk): implicit in-kernel im2col (per-(ky,kx) shifted-tap DMAs via the
    # index_map or manual make_async_copy) would remove the K*K HBM read
    # amplification of this materialized patch slab.
    N, H, W, C = x.shape
    K, P, D = ksize, padding, dilation
    Ho = H + 2 * P - D * (K - 1)
    Wo = W + 2 * P - D * (K - 1)
    if K == 1 and P == 0:
        return x.reshape(N * H * W, C), H, W
    xp = jnp.pad(x, ((0, 0), (P, P), (P, P), (0, 0)))
    taps = [xp[:, ky * D:ky * D + Ho, kx * D:kx * D + Wo, :]
            for ky in range(K) for kx in range(K)]
    patches = jnp.concatenate(taps, axis=-1)                   # (N, Ho, Wo, K*K*C)
    return patches.reshape(N * Ho * Wo, K * K * C), Ho, Wo


# ----------------------------- Pallas kernels ------------------------------ #

def _gemm_stats_kernel(x_ref, w_ref, conv_ref, stats_ref):
    # conv_ref's index_map ignores k -> the f32 output block is VMEM-resident
    # across the reduction axis and doubles as the accumulator (no scratch).
    k = pl.program_id(2)

    @pl.when(k == 0)
    def _init():
        conv_ref[...] = jnp.zeros_like(conv_ref)
        stats_ref[...] = jnp.zeros_like(stats_ref)

    conv_ref[...] += jnp.dot(x_ref[...], w_ref[...],
                             preferred_element_type=jnp.float32)

    @pl.when(k == pl.num_programs(2) - 1)
    def _finalize():
        acc = conv_ref[...]
        stats_ref[0:1, :] = jnp.sum(acc, axis=0, keepdims=True)        # sum
        stats_ref[1:2, :] = jnp.sum(acc * acc, axis=0, keepdims=True)  # sum of sq


def _gemm_kernel(x_ref, w_ref, conv_ref):
    # Stats-free variant for the bias-only head conv (skips XLU reductions +
    # the unused stats output DMA).
    k = pl.program_id(2)

    @pl.when(k == 0)
    def _init():
        conv_ref[...] = jnp.zeros_like(conv_ref)

    conv_ref[...] += jnp.dot(x_ref[...], w_ref[...],
                             preferred_element_type=jnp.float32)


def _affine_act_kernel(conv_ref, scale_ref, shift_ref, o_ref, *, leaky):
    # Folded BN: one FMA per element, optional LeakyReLU(0.1), store in o_ref dtype.
    y = conv_ref[...] * scale_ref[...] + shift_ref[...]
    if leaky:
        y = jnp.where(y >= 0, y, LEAKY_SLOPE * y)
    o_ref[...] = y.astype(o_ref.dtype)


# --------------------------- Pallas call wrappers --------------------------- #

def _gemm(patches_bf16, w_packed, *, compute_stats):
    """Tiled (M,KKC)x(KKC,Cout) MXU GEMM in bf16 with f32 accumulation.

    Zero padding of rows/cols is harmless: with no conv bias, padded rows
    produce zero conv values and contribute nothing to the BN partials; padded
    channels are zeroed later by gamma_pad = 0.
    """
    M, KKC = patches_bf16.shape
    KKC_pad, Cout_pad = w_packed.shape

    # Tile selection: as big as divisibility allows. Worst case tm=512, tn=512,
    # tk=1024 -> ~3 MiB/step live tiles, ~6-8 MiB double-buffered, far below
    # the 48 MiB cap (safe even on v7x's 64 MiB/TC VMEM).
    if M >= 512:
        tm = 512
    elif M >= 256:
        tm = 256
    else:
        tm = _round_up(M, 16)               # bf16 sublane packing
    M_pad = _round_up(M, tm)
    tk = _pick_tile(KKC_pad, (1024, 512, 384, 256, 128))
    tn = _pick_tile(Cout_pad, (512, 256, 128))   # >=256 feeds the 256-wide MXU
    mt, nt, kt = M_pad // tm, Cout_pad // tn, KKC_pad // tk
    # v7x has 2 TensorCores; give the parallel (i, j) axes >= 2 blocks when we can.
    if mt * nt == 1 and tm % 32 == 0:
        tm //= 2
        mt = M_pad // tm

    x = jnp.pad(patches_bf16, ((0, M_pad - M), (0, KKC_pad - KKC)))

    cost = pl.CostEstimate(
        flops=2 * M_pad * KKC_pad * Cout_pad,
        transcendentals=0,
        bytes_accessed=(M_pad * KKC_pad * 2 + KKC_pad * Cout_pad * 2
                        + M_pad * Cout_pad * 4 + mt * 8 * Cout_pad * 4),
    )
    common = dict(
        grid=(mt, nt, kt),                              # reduction axis last
        in_specs=[
            pl.BlockSpec((tm, tk), lambda i, j, k: (i, k)),
            pl.BlockSpec((tk, tn), lambda i, j, k: (k, j)),
        ],
        compiler_params=pltpu.CompilerParams(
            dimension_semantics=("parallel", "parallel", "arbitrary"),
            vmem_limit_bytes=_VMEM_LIMIT,
        ),
        cost_estimate=cost,
    )

    if compute_stats:
        conv_pad, stats = pl.pallas_call(
            _gemm_stats_kernel,
            out_shape=(
                jax.ShapeDtypeStruct((M_pad, Cout_pad), jnp.float32),
                jax.ShapeDtypeStruct((mt * 8, Cout_pad), jnp.float32),
            ),
            out_specs=(
                pl.BlockSpec((tm, tn), lambda i, j, k: (i, j)),
                pl.BlockSpec((8, tn), lambda i, j, k: (i, j)),
            ),
            **common,
        )(x, w_packed)
        return conv_pad, stats

    conv_pad = pl.pallas_call(
        _gemm_kernel,
        out_shape=jax.ShapeDtypeStruct((M_pad, Cout_pad), jnp.float32),
        out_specs=pl.BlockSpec((tm, tn), lambda i, j, k: (i, j)),
        **common,
    )(x, w_packed)
    return conv_pad


def _affine_act(conv_pad, scale, shift, *, leaky, out_dtype):
    """Per-channel scale/shift (+ optional LeakyReLU) over a lane-dense slab.

    HBM-bound pass: uses the largest divisible tiles (>=512 along M whenever the
    GEMM padded M to a 512 multiple) and emits bf16 inter-layer activations.
    """
    M_pad, Cout_pad = conv_pad.shape
    tn = _pick_tile(Cout_pad, (1024, 512, 256, 128))
    tm = _pick_tile(M_pad, (1024, 512, 256, 128, 64, 32, 16))
    mt, nt = M_pad // tm, Cout_pad // tn
    kern = functools.partial(_affine_act_kernel, leaky=leaky)
    return pl.pallas_call(
        kern,
        out_shape=jax.ShapeDtypeStruct((M_pad, Cout_pad), out_dtype),
        grid=(mt, nt),
        in_specs=[
            pl.BlockSpec((tm, tn), lambda i, j: (i, j)),
            pl.BlockSpec((1, tn), lambda i, j: (0, j)),
            pl.BlockSpec((1, tn), lambda i, j: (0, j)),
        ],
        out_specs=pl.BlockSpec((tm, tn), lambda i, j: (i, j)),
        compiler_params=pltpu.CompilerParams(
            dimension_semantics=("parallel", "parallel"),
            vmem_limit_bytes=_VMEM_LIMIT,
        ),
    )(conv_pad, scale.reshape(1, Cout_pad), shift.reshape(1, Cout_pad))


# ------------------------ module-level building blocks ---------------------- #

@functools.partial(jax.jit, static_argnames=("ksize", "padding", "dilation", "cout"))
def conv_bn_leakyrelu_nhwc(x_nhwc, w_packed, gamma_pad, beta_pad,
                           *, ksize, padding=0, dilation=1, cout=None):
    """Conv2d (stride 1, bias cancelled by BN) -> BatchNorm2d(train) -> LeakyReLU(0.1).

    Channels-last bf16 in, channels-last bf16 out (no per-layer transposes)."""
    N = x_nhwc.shape[0]
    patches, Ho, Wo = _im2col_nhwc(x_nhwc.astype(jnp.bfloat16), ksize, padding, dilation)
    M = patches.shape[0]

    conv_pad, stats = _gemm(patches, w_packed, compute_stats=True)
    Cout_pad = conv_pad.shape[1]

    # Batch statistics from in-kernel partials (tiny per-channel vectors).
    mt = stats.shape[0] // 8
    stats = stats.reshape(mt, 8, Cout_pad)
    ch_sum = jnp.sum(stats[:, 0, :], axis=0)
    ch_sq = jnp.sum(stats[:, 1, :], axis=0)
    inv_m = 1.0 / M                              # padded rows contribute zero
    mean = ch_sum * inv_m
    var = jnp.maximum(ch_sq * inv_m - mean * mean, 0.0)   # biased var (PyTorch BN)

    scale = gamma_pad * lax.rsqrt(var + BN_EPS)  # rsqrt once per channel
    shift = beta_pad - mean * scale              # padded lanes: gamma_pad=0 -> 0

    out_pad = _affine_act(conv_pad, scale, shift, leaky=True, out_dtype=jnp.bfloat16)
    return out_pad[:M, :cout].reshape(N, Ho, Wo, cout)


@functools.partial(jax.jit, static_argnames=("cout",))
def conv1x1_bias_nhwc(x_nhwc, w_packed, bias_pad, *, cout):
    """Plain 1x1 Conv2d(stride 1) + bias (no BN / activation) -- conv_7 head."""
    N, H, W, Cin = x_nhwc.shape
    patches = x_nhwc.astype(jnp.bfloat16).reshape(N * H * W, Cin)
    conv_pad = _gemm(patches, w_packed, compute_stats=False)
    Cout_pad = conv_pad.shape[1]
    ones = jnp.ones((Cout_pad,), jnp.float32)
    out_pad = _affine_act(conv_pad, ones, bias_pad, leaky=False, out_dtype=jnp.float32)
    return out_pad[:N * H * W, :cout].reshape(N, H, W, cout)


def maxpool2x2_nhwc(x):
    # glue: nn.MaxPool2d((2,2), 2) as a reshape+max on the channels-last slab.
    N, H, W, C = x.shape
    return x.reshape(N, H // 2, 2, W // 2, 2, C).max(axis=(2, 4))


# ------------------------------ DarkNet-19 --------------------------------- #

_WIDTH = 8          # 1/8 of the original channel widths -> small demo shapes


def _c(ch):
    return max(ch // _WIDTH, 4)


# (in_ch, out_ch, ksize, padding) per Conv_BN_LeakyReLU; "M" = MaxPool2d(2,2)
_DARKNET19_CFG = (
    (1, _c(32), 3, 1), "M",
    (_c(32), _c(64), 3, 1), "M",
    (_c(64), _c(128), 3, 1), (_c(128), _c(64), 1, 0), (_c(64), _c(128), 3, 1), "M",
    (_c(128), _c(256), 3, 1), (_c(256), _c(128), 1, 0), (_c(128), _c(256), 3, 1), "M",
    (_c(256), _c(512), 3, 1), (_c(512), _c(256), 1, 0), (_c(256), _c(512), 3, 1),
    (_c(512), _c(256), 1, 0), (_c(256), _c(512), 3, 1), "M",
    (_c(512), _c(1024), 3, 1), (_c(1024), _c(512), 1, 0), (_c(512), _c(1024), 3, 1),
    (_c(1024), _c(512), 1, 0), (_c(512), _c(1024), 3, 1),
)


def init_darknet19_params(key, num_classes=N_CLASSES):
    """Random init + one-time packing (transpose/pad/bf16-cast) of all weights."""
    blocks = []
    for cfg in _DARKNET19_CFG:
        if cfg == "M":
            continue
        cin, cout, k, _p = cfg
        key, kw, kg, kb = jax.random.split(key, 4)
        w = jax.random.normal(kw, (cout, cin, k, k), jnp.float32) / ((cin * k * k) ** 0.5)
        gamma = 1.0 + 0.1 * jax.random.normal(kg, (cout,), jnp.float32)
        beta = 0.1 * jax.random.normal(kb, (cout,), jnp.float32)
        wp = pack_conv_weight(w)
        cout_pad = wp.shape[1]
        blocks.append((wp, _pad_vec(gamma, cout_pad), _pad_vec(beta, cout_pad), cout))
    key, kw7, kb7 = jax.random.split(key, 3)
    w7 = jax.random.normal(kw7, (num_classes, _c(1024), 1, 1), jnp.float32) / (_c(1024) ** 0.5)
    b7 = 0.1 * jax.random.normal(kb7, (num_classes,), jnp.float32)
    w7p = pack_conv_weight(w7)
    return blocks, (w7p, _pad_vec(b7, w7p.shape[1]), num_classes)


def darknet19_forward(block_params, head_params, x_nchw):
    # One NCHW -> NHWC (+bf16) conversion at the network input; everything else
    # stays channels-last bf16 until the head.
    x = x_nchw.transpose(0, 2, 3, 1).astype(jnp.bfloat16)
    it = iter(block_params)
    for cfg in _DARKNET19_CFG:
        if cfg == "M":
            x = maxpool2x2_nhwc(x)
        else:
            _cin, _cout, k, p = cfg
            wp, gp, bp, cout = next(it)
            x = conv_bn_leakyrelu_nhwc(x, wp, gp, bp, ksize=k, padding=p, cout=cout)
    w7p, b7p, n_cls = head_params
    x = conv1x1_bias_nhwc(x, w7p, b7p, cout=n_cls)
    x = jnp.mean(x, axis=(1, 2))        # AdaptiveAvgPool2d((1,1)) + flatten (NHWC)
    return x


# ------------------------------- reference --------------------------------- #

def _block_reference(x, w, b, gamma, beta, *, ksize, padding, dilation=1):
    """Training-mode Conv_BN_LeakyReLU reference (bf16 conv inputs, f32 math)."""
    conv = lax.conv_general_dilated(
        x.astype(jnp.bfloat16), w.astype(jnp.bfloat16),
        window_strides=(1, 1),
        padding=((padding, padding), (padding, padding)),
        rhs_dilation=(dilation, dilation),
        dimension_numbers=("NCHW", "OIHW", "NCHW"),
        preferred_element_type=jnp.float32,
    ) + b[None, :, None, None]
    mean = jnp.mean(conv, axis=(0, 2, 3), keepdims=True)
    var = jnp.mean((conv - mean) ** 2, axis=(0, 2, 3), keepdims=True)
    y = ((conv - mean) / jnp.sqrt(var + BN_EPS) * gamma[None, :, None, None]
         + beta[None, :, None, None])
    return jnp.where(y >= 0, y, LEAKY_SLOPE * y)


def _conv_bn_leakyrelu_nchw(x_nchw, weight, gamma, beta, *, ksize, padding=0, dilation=1):
    """Test wrapper: pack weight, run the NHWC kernel core, return NCHW f32."""
    cout = weight.shape[0]
    wp = pack_conv_weight(weight)
    cout_pad = wp.shape[1]
    x_nhwc = x_nchw.transpose(0, 2, 3, 1).astype(jnp.bfloat16)
    y = conv_bn_leakyrelu_nhwc(x_nhwc, wp, _pad_vec(gamma, cout_pad),
                               _pad_vec(beta, cout_pad),
                               ksize=ksize, padding=padding, dilation=dilation,
                               cout=cout)
    return y.astype(jnp.float32).transpose(0, 3, 1, 2)


# ---------------------------------- main ----------------------------------- #

if __name__ == "__main__":
    key = jax.random.PRNGKey(0)

    # Test 1: Conv_BN_LeakyReLU(4, 8, 3, padding=1) at (2, 4, 16, 16)
    k1, k2, k3, k4, k5, key = jax.random.split(key, 6)
    x1 = jax.random.normal(k1, (2, 4, 16, 16), jnp.float32)
    w1 = 0.1 * jax.random.normal(k2, (8, 4, 3, 3), jnp.float32)
    b1 = 0.1 * jax.random.normal(k3, (8,), jnp.float32)   # cancelled by BN
    g1 = 1.0 + 0.1 * jax.random.normal(k4, (8,), jnp.float32)
    be1 = 0.1 * jax.random.normal(k5, (8,), jnp.float32)
    out1 = jax.block_until_ready(
        _conv_bn_leakyrelu_nchw(x1, w1, g1, be1, ksize=3, padding=1))
    ref1 = _block_reference(x1, w1, b1, g1, be1, ksize=3, padding=1)
    assert out1.shape == (2, 8, 16, 16), out1.shape
    # bf16 activation output -> ~half-ulp (|y|<~4 => <~0.016) quantization error.
    assert jnp.allclose(out1, ref1, atol=3e-2, rtol=3e-2), \
        float(jnp.max(jnp.abs(out1 - ref1)))

    # Test 2: multi-K-tile reduction path (Cin=64 -> KKC_pad=640, 5 K tiles)
    k1, k2, k3, k4, k5, key = jax.random.split(key, 6)
    x2 = jax.random.normal(k1, (2, 64, 8, 8), jnp.float32)
    w2 = 0.05 * jax.random.normal(k2, (16, 64, 3, 3), jnp.float32)
    b2 = 0.1 * jax.random.normal(k3, (16,), jnp.float32)
    g2 = 1.0 + 0.1 * jax.random.normal(k4, (16,), jnp.float32)
    be2 = 0.1 * jax.random.normal(k5, (16,), jnp.float32)
    out2 = jax.block_until_ready(
        _conv_bn_leakyrelu_nchw(x2, w2, g2, be2, ksize=3, padding=1))
    ref2 = _block_reference(x2, w2, b2, g2, be2, ksize=3, padding=1)
    assert out2.shape == (2, 16, 8, 8), out2.shape
    assert jnp.allclose(out2, ref2, atol=3e-2, rtol=3e-2), \
        float(jnp.max(jnp.abs(out2 - ref2)))

    # Full DarkNet-19 forward at 1/8 channel width, input (2, 1, 32, 32)
    kp, kx = jax.random.split(key)
    block_params, head_params = init_darknet19_params(kp)
    x_img = jax.random.normal(kx, (2, 1, 32, 32), jnp.float32)
    logits = jax.block_until_ready(darknet19_forward(block_params, head_params, x_img))
    assert logits.shape == (2, N_CLASSES), logits.shape
    assert bool(jnp.all(jnp.isfinite(logits)))

    print("KERNEL_OK")
</pallas_src>

<mosaic_0001>
module attributes {stable_mosaic.version = 11 : i64} {
  func.func @_gemm_stats_kernel(%arg0: i32, %arg1: i32, %arg2: i32, %arg3: memref<256x128xbf16, #tpu.memory_space<vmem>>, %arg4: memref<128x128xbf16, #tpu.memory_space<vmem>>, %arg5: memref<256x128xf32, #tpu.memory_space<vmem>>, %arg6: memref<8x128xf32, #tpu.memory_space<vmem>>) attributes {dimension_semantics = [#tpu.dimension_semantics<parallel>, #tpu.dimension_semantics<parallel>, #tpu.dimension_semantics<arbitrary>], iteration_bounds = array<i64: 2, 1, 1>, scalar_prefetch = 0 : i64, scratch_operands = 0 : i64, tpu.core_type = #tpu.core_type<tc>, window_params = [{transform_indices = @transform_0, window_bounds = array<i64: 256, 128>}, {transform_indices = @transform_1, window_bounds = array<i64: 128, 128>}, {transform_indices = @transform_2, window_bounds = array<i64: 256, 128>}, {transform_indices = @transform_3, window_bounds = array<i64: 8, 128>}]} {
    %c0_i32 = arith.constant 0 : i32
    %0 = arith.cmpi eq, %arg2, %c0_i32 : i32
    %1 = arith.extui %0 : i1 to i32
    %c0_i32_0 = arith.constant 0 : i32
    %2 = arith.cmpi ne, %1, %c0_i32_0 : i32
    scf.if %2 {
      %cst_10 = arith.constant 0.000000e+00 : f32
      %12 = vector.broadcast %cst_10 : f32 to vector<256x128xf32>
      %c0_11 = arith.constant 0 : index
      %c0_12 = arith.constant 0 : index
      %13 = vector.load %arg5[%c0_11, %c0_12] : memref<256x128xf32, #tpu.memory_space<vmem>>, vector<256x128xf32>
      tpu.vector_store %arg5[%c0_11, %c0_12], %12 {strides = array<i32>} : memref<256x128xf32, #tpu.memory_space<vmem>>, vector<256x128xf32>,
      %cst_13 = arith.constant 0.000000e+00 : f32
      %14 = vector.broadcast %cst_13 : f32 to vector<8x128xf32>
      %c0_14 = arith.constant 0 : index
      %c0_15 = arith.constant 0 : index
      %15 = vector.load %arg6[%c0_14, %c0_15] : memref<8x128xf32, #tpu.memory_space<vmem>>, vector<8x128xf32>
      tpu.vector_store %arg6[%c0_14, %c0_15], %14 {strides = array<i32>} : memref<8x128xf32, #tpu.memory_space<vmem>>, vector<8x128xf32>,
    } else {
    }
    %c0 = arith.constant 0 : index
    %c0_1 = arith.constant 0 : index
    %3 = vector.load %arg5[%c0, %c0_1] : memref<256x128xf32, #tpu.memory_space<vmem>>, vector<256x128xf32>
    %c0_2 = arith.constant 0 : index
    %c0_3 = arith.constant 0 : index
    %4 = vector.load %arg3[%c0_2, %c0_3] : memref<256x128xbf16, #tpu.memory_space<vmem>>, vector<256x128xbf16>
    %c0_4 = arith.constant 0 : index
    %c0_5 = arith.constant 0 : index
    %5 = vector.load %arg4[%c0_4, %c0_5] : memref<128x128xbf16, #tpu.memory_space<vmem>>, vector<128x128xbf16>
    %cst = arith.constant dense<0.000000e+00> : vector<256x128xf32>
    %6 = tpu.matmul %4, %5, %cst {dimension_numbers = #tpu.dot_dimension_numbers<[1], [0], [0], [1], [0, 0, 1, 1], [], []>} : vector<256x128xbf16>, vector<128x128xbf16>, vector<256x128xf32> -> vector<256x128xf32>
    %7 = arith.addf %3, %6 : vector<256x128xf32>
    %c0_6 = arith.constant 0 : index
    %c0_7 = arith.constant 0 : index
    %8 = vector.load %arg5[%c0_6, %c0_7] : memref<256x128xf32, #tpu.memory_space<vmem>>, vector<256x128xf32>
    tpu.vector_store %arg5[%c0_6, %c0_7], %7 {strides = array<i32>} : memref<256x128xf32, #tpu.memory_space<vmem>>, vector<256x128xf32>,
    %c0_i32_8 = arith.constant 0 : i32
    %9 = arith.cmpi eq, %arg2, %c0_i32_8 : i32
    %10 = arith.extui %9 : i1 to i32
    %c0_i32_9 = arith.constant 0 : i32
    %11 = arith.cmpi ne, %10, %c0_i32_9 : i32
    scf.if %11 {
      %c0_10 = arith.constant 0 : index
      %c0_11 = arith.constant 0 : index
      %12 = vector.load %arg5[%c0_10, %c0_11] : memref<256x128xf32, #tpu.memory_space<vmem>>, vector<256x128xf32>
      %cst_12 = arith.constant dense<0.000000e+00> : vector<128xf32>
      %13 = vector.multi_reduction <add>, %12, %cst_12 [0] : vector<256x128xf32> to vector<128xf32>
      %14 = vector.shape_cast %13 : vector<128xf32> to vector<1x128xf32>
      %c0_13 = arith.constant 0 : index
      %c0_14 = arith.constant 0 : index
      %15 = vector.load %arg6[%c0_13, %c0_14] : memref<8x128xf32, #tpu.memory_space<vmem>>, vector<1x128xf32>
      tpu.vector_store %arg6[%c0_13, %c0_14], %14 {strides = array<i32>} : memref<8x128xf32, #tpu.memory_space<vmem>>, vector<1x128xf32>,
      %16 = arith.mulf %12, %12 : vector<256x128xf32>
      %cst_15 = arith.constant dense<0.000000e+00> : vector<128xf32>
      %17 = vector.multi_reduction <add>, %16, %cst_15 [0] : vector<256x128xf32> to vector<128xf32>
      %18 = vector.shape_cast %17 : vector<128xf32> to vector<1x128xf32>
      %c1 = arith.constant 1 : index
      %c0_16 = arith.constant 0 : index
      %19 = vector.load %arg6[%c1, %c0_16] : memref<8x128xf32, #tpu.memory_space<vmem>>, vector<1x128xf32>
      tpu.vector_store %arg6[%c1, %c0_16], %18 {strides = array<i32>} : memref<8x128xf32, #tpu.memory_space<vmem>>, vector<1x128xf32>,
    } else {
    }
    return
  }
  func.func @transform_0(%arg0: i32, %arg1: i32, %arg2: i32) -> (i32, i32) {
    %c0_i32 = arith.constant 0 : i32
    return %arg0, %arg2 : i32, i32
  }
  func.func @transform_1(%arg0: i32, %arg1: i32, %arg2: i32) -> (i32, i32) {
    %c0_i32 = arith.constant 0 : i32
    return %arg2, %arg1 : i32, i32
  }
  func.func @transform_2(%arg0: i32, %arg1: i32, %arg2: i32) -> (i32, i32) {
    %c0_i32 = arith.constant 0 : i32
    return %arg0, %arg1 : i32, i32
  }
  func.func @transform_3(%arg0: i32, %arg1: i32, %arg2: i32) -> (i32, i32) {
    %c0_i32 = arith.constant 0 : i32
    return %arg0, %arg1 : i32, i32
  }
}

module attributes {stable_mosaic.version = 11 : i64} {
  func.func @_affine_act_kernel(%arg0: i32, %arg1: i32, %arg2: memref<512x128xf32, #tpu.memory_space<vmem>>, %arg3: memref<1x128xf32, #tpu.memory_space<vmem>>, %arg4: memref<1x128xf32, #tpu.memory_space<vmem>>, %arg5: memref<512x128xbf16, #tpu.memory_space<vmem>>) attributes {dimension_semantics = [#tpu.dimension_semantics<parallel>, #tpu.dimension_semantics<parallel>], iteration_bounds = array<i64: 1, 1>, scalar_prefetch = 0 : i64, scratch_operands = 0 : i64, tpu.core_type = #tpu.core_type<tc>, window_params = [{transform_indices = @transform_0, window_bounds = array<i64: 512, 128>}, {transform_indices = @transform_1, window_bounds = array<i64: 1, 128>}, {transform_indices = @transform_2, window_bounds = array<i64: 1, 128>}, {transform_indices = @transform_3, window_bounds = array<i64: 512, 128>}]} {
    %c0 = arith.constant 0 : index
    %c0_0 = arith.constant 0 : index
    %0 = vector.load %arg2[%c0, %c0_0] : memref<512x128xf32, #tpu.memory_space<vmem>>, vector<512x128xf32>
    %c0_1 = arith.constant 0 : index
    %c0_2 = arith.constant 0 : index
    %1 = vector.load %arg3[%c0_1, %c0_2] : memref<1x128xf32, #tpu.memory_space<vmem>>, vector<1x128xf32>
    %2 = vector.broadcast %1 : vector<1x128xf32> to vector<512x128xf32>
    %3 = arith.mulf %0, %2 : vector<512x128xf32>
    %c0_3 = arith.constant 0 : index
    %c0_4 = arith.constant 0 : index
    %4 = vector.load %arg4[%c0_3, %c0_4] : memref<1x128xf32, #tpu.memory_space<vmem>>, vector<1x128xf32>
    %5 = vector.broadcast %4 : vector<1x128xf32> to vector<512x128xf32>
    %6 = arith.addf %3, %5 : vector<512x128xf32>
    %cst = arith.constant 0.000000e+00 : f32
    %7 = vector.broadcast %cst : f32 to vector<512x128xf32>
    %8 = arith.cmpf oge, %6, %7 : vector<512x128xf32>
    %cst_5 = arith.constant 1.000000e-01 : f32
    %9 = vector.broadcast %cst_5 : f32 to vector<512x128xf32>
    %10 = arith.mulf %9, %6 : vector<512x128xf32>
    %11 = arith.select %8, %6, %10 : vector<512x128xi1>, vector<512x128xf32>
    %12 = arith.truncf %11 : vector<512x128xf32> to vector<512x128xbf16>
    %c0_6 = arith.constant 0 : index
    %c0_7 = arith.constant 0 : index
    %13 = vector.load %arg5[%c0_6, %c0_7] : memref<512x128xbf16, #tpu.memory_space<vmem>>, vector<512x128xbf16>
    tpu.vector_store %arg5[%c0_6, %c0_7], %12 {strides = array<i32>} : memref<512x128xbf16, #tpu.memory_space<vmem>>, vector<512x128xbf16>,
    return
  }
  func.func @transform_0(%arg0: i32, %arg1: i32) -> (i32, i32) {
    %c0_i32 = arith.constant 0 : i32
    return %arg0, %arg1 : i32, i32
  }
  func.func @transform_1(%arg0: i32, %arg1: i32) -> (i32, i32) {
    %c0_i32 = arith.constant 0 : i32
    %c0_i32_0 = arith.constant 0 : i32
    return %c0_i32, %arg1 : i32, i32
  }
  func.func @transform_2(%arg0: i32, %arg1: i32) -> (i32, i32) {
    %c0_i32 = arith.constant 0 : i32
    %c0_i32_0 = arith.constant 0 : i32
    return %c0_i32, %arg1 : i32, i32
  }
  func.func @transform_3(%arg0: i32, %arg1: i32) -> (i32, i32) {
    %c0_i32 = arith.constant 0 : i32
    return %arg0, %arg1 : i32, i32
  }
}

</mosaic_0001>

<llo_original>
// kernel: conv_bn_leakyrelu_nhwc.2
$region0: #{conv_bn_leakyrelu_nhwc.2}
  #allocation0 [shape = 'u32[]', space=smem, size = 0x4, offset = 0x4, fixed_abs, tag = 'smem constant byte address 0x4 - core index']
  #allocation1 [shape = 'u32[144,128]{1,0:T(1,128)}', space=vmem, size = 0x12000, scoped, tag = 'internal scratch']
  %s0 = inlined_call_operand.vmem [shape: bf16[512,128], index: 0, kind: input, shape index: {}]
  %s1 = inlined_call_operand.vmem [shape: bf16[128,128], index: 1, kind: input, shape index: {}]
  %s2 = inlined_call_operand.vmem [shape: f32[512,128], index: 2, kind: output, shape index: {0}]
  %s3 = inlined_call_operand.vmem [shape: f32[16,128], index: 3, kind: output, shape index: {1}]
  %4 = xla_tuple %s2, %s3
  %s5 = sld [smem:[#allocation0]]
  $region57: #{conv_bn_leakyrelu_nhwc.2} parent=0
    _
  %s7 = ssub.s32 1, %s5
  %s8 = scalar_select 0, %s7, %s5
  loop: start=0, step=1, limit=4
  $region2: #{conv_bn_leakyrelu_nhwc.2} parent=0 // loop_pre_header
    _
  $region3: #{conv_bn_leakyrelu_nhwc.2} parent=0 // loop_header
    %s10 = sphi 0, %s14
    %p11 = scmp.ge.s32.totalorder %s10, 4
    %s17 = sphi 0, %s36
    %s18 = sphi 0, %s32
    %s19 = sphi 0, %s28
    %s20 = sphi 0, %s17
    %s21 = sphi 0, %s18
    %s22 = sphi 0, %s19
    %s23 = sphi 0, %s20
    %s24 = sphi 0, %s21
    %s25 = sphi 0, %s22
    %s41 = sphi 0, %s43
    %s44 = sphi 0, %s41
    %s45 = sphi 0, %s44
    %s61 = sphi 0, %s45
    %s69 = sphi 0, %s71
    %s72 = sphi 0, %s69
    %s73 = sphi 0, %s72
    %s89 = sphi 0, %s73
    %s97 = sphi 0, %s99
    %s100 = sphi 0, %s97
    %s101 = sphi 0, %s100
    %s117 = sphi 0, %s101
    %s125 = sphi 0, %s127
    %s128 = sphi 0, %s125
    %s129 = sphi 0, %s128
    %s145 = sphi 0, %s129
  $region4: #{conv_bn_leakyrelu_nhwc.2} parent=0 // loop_header_branch
    %13 = sbr.rel (%p11) target = $region8
  $region5: #{conv_bn_leakyrelu_nhwc.2} parent=0 // loop_body
    %s15 = ssub.s32 %s10, 1
    %s16 = ssub.s32 %s10, 2
    %s26 = sadd.s32 1, %s19
    %p27 = scmp.ge.s32.totalorder %s26, 1
    %s28 = scalar_select %p27, 0, %s26
    %s29 = sadd.s32 1, %s18
    %s30 = scalar_select %p27, %s29, %s18
    %p31 = scmp.ge.s32.totalorder %s30, 1
    %s32 = scalar_select %p31, 0, %s30
    %s33 = sadd.s32 1, %s17
    %s34 = scalar_select %p31, %s33, %s17
    %p35 = scmp.ge.s32.totalorder %s34, 2
    %s36 = scalar_select %p35, 0, %s34
    %s37 = ssub.s32 %s17, %s36
    %s38 = ssub.s32 %s19, %s28
    %s39 = sor.u32 %s37, %s38
    %p40 = scmp.eq.s32.totalorder %s39, 0
    %s42 = sadd.s32 %s41, 1
    %s43 = scalar_select %p40, %s41, %s42
    %p46 = pneg %p40
    %p47 = scmp.eq.s32.totalorder %s10, 1
    %p48 = por %p46, %p47
    %p49 = scmp.ne.s32.totalorder %s41, %s44
    %p50 = scmp.eq.s32.totalorder %s10, 0
    %p51 = por %p49, %p50
    %p52 = scmp.ne.s32.totalorder %s41, %s44
    %p53 = scmp.eq.s32.totalorder %s15, 1
    %p54 = por %p52, %p53
    %p55 = scmp.ne.s32.totalorder %s44, %s45
    %p56 = scmp.eq.s32.totalorder %s15, 0
    %p57 = por %p55, %p56
    %p58 = scmp.ne.s32.totalorder %s44, %s45
    %p59 = scmp.eq.s32.totalorder %s16, 1
    %p60 = por %p58, %p59
    %p62 = scmp.ne.s32.totalorder %s45, %s61
    %p63 = scmp.eq.s32.totalorder %s16, 0
    %p64 = por %p62, %p63
    %s65 = ssub.s32 %s19, %s28
    %s66 = ssub.s32 %s18, %s32
    %s67 = sor.u32 %s65, %s66
    %p68 = scmp.eq.s32.totalorder %s67, 0
    %s70 = sadd.s32 %s69, 1
    %s71 = scalar_select %p68, %s69, %s70
    %p74 = pneg %p68
    %p75 = scmp.eq.s32.totalorder %s10, 1
    %p76 = por %p74, %p75
    %p77 = scmp.ne.s32.totalorder %s69, %s72
    %p78 = scmp.eq.s32.totalorder %s10, 0
    %p79 = por %p77, %p78
    %p80 = scmp.ne.s32.totalorder %s69, %s72
    %p81 = scmp.eq.s32.totalorder %s15, 1
    %p82 = por %p80, %p81
    %p83 = scmp.ne.s32.totalorder %s72, %s73
    %p84 = scmp.eq.s32.totalorder %s15, 0
    %p85 = por %p83, %p84
    %p86 = scmp.ne.s32.totalorder %s72, %s73
    %p87 = scmp.eq.s32.totalorder %s16, 1
    %p88 = por %p86, %p87
    %p90 = scmp.ne.s32.totalorder %s73, %s89
    %p91 = scmp.eq.s32.totalorder %s16, 0
    %p92 = por %p90, %p91
    %s93 = ssub.s32 %s17, %s36
    %s94 = ssub.s32 %s18, %s32
    %s95 = sor.u32 %s93, %s94
    %p96 = scmp.eq.s32.totalorder %s95, 0
    %s98 = sadd.s32 %s97, 1
    %s99 = scalar_select %p96, %s97, %s98
    %p102 = pneg %p96
    %p103 = scmp.eq.s32.totalorder %s10, 1
    %p104 = por %p102, %p103
    %p105 = scmp.ne.s32.totalorder %s97, %s100
    %p106 = scmp.eq.s32.totalorder %s10, 0
    %p107 = por %p105, %p106
    %p108 = scmp.ne.s32.totalorder %s97, %s100
    %p109 = scmp.eq.s32.totalorder %s15, 1
    %p110 = por %p108, %p109
    %p111 = scmp.ne.s32.totalorder %s100, %s101
    %p112 = scmp.eq.s32.totalorder %s15, 0
    %p113 = por %p111, %p112
    %p114 = scmp.ne.s32.totalorder %s100, %s101
    %p115 = scmp.eq.s32.totalorder %s16, 1
    %p116 = por %p114, %p115
    %p118 = scmp.ne.s32.totalorder %s101, %s117
    %p119 = scmp.eq.s32.totalorder %s16, 0
    %p120 = por %p118, %p119
    %s121 = ssub.s32 %s17, %s36
    %s122 = ssub.s32 %s18, %s32
    %s123 = sor.u32 %s121, %s122
    %p124 = scmp.eq.s32.totalorder %s123, 0
    %s126 = sadd.s32 %s125, 1
    %s127 = scalar_select %p124, %s125, %s126
    %p130 = pneg %p124
    %p131 = scmp.eq.s32.totalorder %s10, 1
    %p132 = por %p130, %p131
    %p133 = scmp.ne.s32.totalorder %s125, %s128
    %p134 = scmp.eq.s32.totalorder %s10, 0
    %p135 = por %p133, %p134
    %p136 = scmp.ne.s32.totalorder %s125, %s128
    %p137 = scmp.eq.s32.totalorder %s15, 1
    %p138 = por %p136, %p137
    %p139 = scmp.ne.s32.totalorder %s128, %s129
    %p140 = scmp.eq.s32.totalorder %s15, 0
    %p141 = por %p139, %p140
    %p142 = scmp.ne.s32.totalorder %s128, %s129
    %p143 = scmp.eq.s32.totalorder %s16, 1
    %p144 = por %p142, %p143
    %p146 = scmp.ne.s32.totalorder %s129, %s145
    %p147 = scmp.eq.s32.totalorder %s16, 0
    %p148 = por %p146, %p147
    %p149 = scmp.le.s32.totalorder 1, %s10
    %p150 = scmp.lt.s32.totalorder %s10, 3
    %p151 = pnand %p149, %p150
    %p152 = pneg %p151
    // Predicated region
    $region9: #{conv_bn_leakyrelu_nhwc.2} parent=5 // pred_check
      _
    $region10: #{conv_bn_leakyrelu_nhwc.2} parent=5 // pred_check_branch
      %154 = sbr.rel (%p151) target = $region12
    $region11: #{conv_bn_leakyrelu_nhwc.2} parent=5 // pred_region
      %s155 = ssub.s32 %s10, 1
      // Predicated region
      $region13: #{conv_bn_leakyrelu_nhwc.2} parent=11 // pred_check
        %p156 = pneg %p85
      $region14: #{conv_bn_leakyrelu_nhwc.2} parent=11 // pred_check_branch
        %158 = sbr.rel (%p156) target = $region16
      $region15: #{conv_bn_leakyrelu_nhwc.2} parent=11 // pred_region
        %s159 = smul.u32 16, %s22
        %p160 = scmp.lt.s32.totalorder %s159, 15
        %s161 = scalar_select %p160, %s159, 15
        %p162 = scmp.lt.s32.totalorder %s21, 0
        %s163 = scalar_select %p162, %s21, 0
        %s164 = sadd.s32 %s163, %s161
        %s165 = smul.addr %s164, 4
        %s166 = scalar_lea.vmem %s1, %s165
        %s167 = smul.u32 16, %s22
      $region16: #{conv_bn_leakyrelu_nhwc.2} parent=11 // pred_fallthru
        _
    $region12: #{conv_bn_leakyrelu_nhwc.2} parent=5 // pred_fallthru
      _
    %p168 = scmp.lt.s32.totalorder %s10, 2
    // Predicated region
    $region17: #{conv_bn_leakyrelu_nhwc.2} parent=5 // pred_check
      %p169 = pneg %p168
    $region18: #{conv_bn_leakyrelu_nhwc.2} parent=5 // pred_check_branch
      %171 = sbr.rel (%p169) target = $region20
    $region19: #{conv_bn_leakyrelu_nhwc.2} parent=5 // pred_region
      // Predicated region
      $region21: #{conv_bn_leakyrelu_nhwc.2} parent=19 // pred_check
        %p172 = pneg %p51
      $region22: #{conv_bn_leakyrelu_nhwc.2} parent=19 // pred_check_branch
        %174 = sbr.rel (%p172) target = $region24
      $region23: #{conv_bn_leakyrelu_nhwc.2} parent=19 // pred_region
        %s175 = smul.u32 32, %s17
        %p176 = scmp.lt.s32.totalorder %s175, 63
        %s177 = scalar_select %p176, %s175, 63
        %p178 = scmp.lt.s32.totalorder %s19, 0
        %s179 = scalar_select %p178, %s19, 0
        %s180 = sadd.s32 %s179, %s177
        %s181 = smul.addr %s180, 4
        %s182 = scalar_lea.vmem %s0, %s181
        %s183 = smul.u32 32, %s17
      $region24: #{conv_bn_leakyrelu_nhwc.2} parent=19 // pred_fallthru
        _
    $region20: #{conv_bn_leakyrelu_nhwc.2} parent=5 // pred_fallthru
      _
    %p184 = scmp.le.s32.totalorder 1, %s10
    %p185 = scmp.lt.s32.totalorder %s10, 3
    %p186 = pnand %p184, %p185
    %p187 = pneg %p186
    // Predicated region
    $region25: #{conv_bn_leakyrelu_nhwc.2} parent=5 // pred_check
      _
    $region26: #{conv_bn_leakyrelu_nhwc.2} parent=5 // pred_check_branch
      %189 = sbr.rel (%p186) target = $region28
    $region27: #{conv_bn_leakyrelu_nhwc.2} parent=5 // pred_region
      %s190 = ssub.s32 %s10, 1
      %s191 = smul.u32 32, %s20
      %p192 = scmp.lt.s32.totalorder %s191, 63
      %s193 = scalar_select %p192, %s191, 63
      %p194 = scmp.lt.s32.totalorder %s22, 0
      %s195 = scalar_select %p194, %s22, 0
      %s196 = sadd.s32 %s195, %s193
      %s197 = smul.addr %s196, 4
      %s198 = scalar_lea.vmem %s0, %s197
      %p199 = pneg %p57
      %p200 = pneg %p54
      %s201 = smul.u32 16, %s22
      %p202 = scmp.lt.s32.totalorder %s201, 15
      %s203 = scalar_select %p202, %s201, 15
      %p204 = scmp.lt.s32.totalorder %s21, 0
      %s205 = scalar_select %p204, %s21, 0
      %s206 = sadd.s32 %s205, %s203
      %s207 = smul.addr %s206, 4
      %s208 = scalar_lea.vmem %s1, %s207
      %p209 = pneg %p85
      %p210 = pneg %p82
      %p211 = pneg %p113
      %p212 = pneg %p110
      %s213 = smul.u32 32, %s20
      %p214 = scmp.lt.s32.totalorder %s213, 63
      %s215 = scalar_select %p214, %s213, 63
      %p216 = scmp.lt.s32.totalorder %s21, 0
      %s217 = scalar_select %p216, %s21, 0
      %s218 = sadd.s32 %s217, %s215
      %s219 = smul.addr %s218, 8
      %s220 = scalar_lea.vmem %s2, %s219
      %p221 = pneg %p141
      %p222 = pneg %p138
      %p223 = scmp.lt.s32.totalorder %s20, 1
      %s224 = scalar_select %p223, %s20, 1
      %p225 = scmp.lt.s32.totalorder %s21, 0
      %s226 = scalar_select %p225, %s21, 0
      %s227 = sadd.s32 %s226, %s224
      %s228 = smul.addr %s227, 8
      %s229 = scalar_lea.vmem %s3, %s228
      %s230 = smul.u32 32, %s20
      %p231 = scmp.lt.s32.totalorder %s230, 63
      %s232 = scalar_select %p231, %s230, 63
      %p233 = scmp.lt.s32.totalorder %s22, 0
      %s234 = scalar_select %p233, %s22, 0
      %s235 = sadd.s32 %s234, %s232
      %s236 = smul.addr %s235, 4
      %s237 = scalar_lea.vmem %s0, %s236
      %s238 = smul.u32 32, %s20
      %s239 = smul.u32 16, %s22
      %p240 = scmp.lt.s32.totalorder %s239, 15
      %s241 = scalar_select %p240, %s239, 15
      %p242 = scmp.lt.s32.totalorder %s21, 0
      %s243 = scalar_select %p242, %s21, 0
      %s244 = sadd.s32 %s243, %s241
      %s245 = smul.addr %s244, 4
      %s246 = scalar_lea.vmem %s1, %s245
      %s247 = smul.u32 16, %s22
      %s248 = smul.u32 32, %s20
      %p249 = scmp.lt.s32.totalorder %s248, 63
      %s250 = scalar_select %p249, %s248, 63
      %p251 = scmp.lt.s32.totalorder %s21, 0
      %s252 = scalar_select %p251, %s21, 0
      %s253 = sadd.s32 %s252, %s250
      %s254 = smul.addr %s253, 8
      %s255 = scalar_lea.vmem %s2, %s254
      %s256 = smul.u32 32, %s20
      %p257 = scmp.lt.s32.totalorder %s20, 1
      %s258 = scalar_select %p257, %s20, 1
      %p259 = scmp.lt.s32.totalorder %s21, 0
      %s260 = scalar_select %p259, %s21, 0
      %s261 = sadd.s32 %s260, %s258
      %s262 = smul.addr %s261, 8
      %s263 = scalar_lea.vmem %s3, %s262
      %p265 = scmp.eq.s32.totalorder %s22, 0
      // Predicated region
      $region29: #{conv_bn_leakyrelu_nhwc.2} parent=27 // pred_check
        %p266 = pneg %p265
      $region30: #{conv_bn_leakyrelu_nhwc.2} parent=27 // pred_check_branch
        %268 = sbr.rel (%p266) target = $region32
      $region31: #{conv_bn_leakyrelu_nhwc.2} parent=27 // pred_region
        %269 = vst [vmem:[%s255] sm:$0xff] 0.0
        %270 = vst [vmem:[%s255 + $0x8] sm:$0xff] 0.0
        %271 = vst [vmem:[%s255 + $0x10] sm:$0xff] 0.0
        %272 = vst [vmem:[%s255 + $0x18] sm:$0xff] 0.0
        %273 = vst [vmem:[%s255 + $0x20] sm:$0xff] 0.0
        %274 = vst [vmem:[%s255 + $0x28] sm:$0xff] 0.0
        %275 = vst [vmem:[%s255 + $0x30] sm:$0xff] 0.0
        %276 = vst [vmem:[%s255 + $0x38] sm:$0xff] 0.0
        %277 = vst [vmem:[%s255 + $0x40] sm:$0xff] 0.0
        %278 = vst [vmem:[%s255 + $0x48] sm:$0xff] 0.0
        %279 = vst [vmem:[%s255 + $0x50] sm:$0xff] 0.0
        %280 = vst [vmem:[%s255 + $0x58] sm:$0xff] 0.0
        %281 = vst [vmem:[%s255 + $0x60] sm:$0xff] 0.0
        %282 = vst [vmem:[%s255 + $0x68] sm:$0xff] 0.0
        %283 = vst [vmem:[%s255 + $0x70] sm:$0xff] 0.0
        %284 = vst [vmem:[%s255 + $0x78] sm:$0xff] 0.0
        %285 = vst [vmem:[%s255 + $0x80] sm:$0xff] 0.0
        %286 = vst [vmem:[%s255 + $0x88] sm:$0xff] 0.0
        %287 = vst [vmem:[%s255 + $0x90] sm:$0xff] 0.0
        %288 = vst [vmem:[%s255 + $0x98] sm:$0xff] 0.0
        %289 = vst [vmem:[%s255 + $0xa0] sm:$0xff] 0.0
        %290 = vst [vmem:[%s255 + $0xa8] sm:$0xff] 0.0
        %291 = vst [vmem:[%s255 + $0xb0] sm:$0xff] 0.0
        %292 = vst [vmem:[%s255 + $0xb8] sm:$0xff] 0.0
        %293 = vst [vmem:[%s255 + $0xc0] sm:$0xff] 0.0
        %294 = vst [vmem:[%s255 + $0xc8] sm:$0xff] 0.0
        %295 = vst [vmem:[%s255 + $0xd0] sm:$0xff] 0.0
        %296 = vst [vmem:[%s255 + $0xd8] sm:$0xff] 0.0
        %297 = vst [vmem:[%s255 + $0xe0] sm:$0xff] 0.0
        %298 = vst [vmem:[%s255 + $0xe8] sm:$0xff] 0.0
        %299 = vst [vmem:[%s255 + $0xf0] sm:$0xff] 0.0
        %300 = vst [vmem:[%s255 + $0xf8] sm:$0xff] 0.0
        %301 = vst [vmem:[%s263] sm:$0xff] 0.0
      $region32: #{conv_bn_leakyrelu_nhwc.2} parent=27 // pred_fallthru
        _
      %v302 = vld [vmem:[%s255] sm:$0xff]
      %v303 = vld [vmem:[%s255 + $0x8] sm:$0xff]
      %v304 = vld [vmem:[%s255 + $0x10] sm:$0xff]
      %v305 = vld [vmem:[%s255 + $0x18] sm:$0xff]
      %v306 = vld [vmem:[%s255 + $0x20] sm:$0xff]
      %v307 = vld [vmem:[%s255 + $0x28] sm:$0xff]
      %v308 = vld [vmem:[%s255 + $0x30] sm:$0xff]
      %v309 = vld [vmem:[%s255 + $0x38] sm:$0xff]
      %v310 = vld [vmem:[%s255 + $0x40] sm:$0xff]
      %v311 = vld [vmem:[%s255 + $0x48] sm:$0xff]
      %v312 = vld [vmem:[%s255 + $0x50] sm:$0xff]
      %v313 = vld [vmem:[%s255 + $0x58] sm:$0xff]
      %v314 = vld [vmem:[%s255 + $0x60] sm:$0xff]
      %v315 = vld [vmem:[%s255 + $0x68] sm:$0xff]
      %v316 = vld [vmem:[%s255 + $0x70] sm:$0xff]
      %v317 = vld [vmem:[%s255 + $0x78] sm:$0xff]
      %v318 = vld [vmem:[%s255 + $0x80] sm:$0xff]
      %v319 = vld [vmem:[%s255 + $0x88] sm:$0xff]
      %v320 = vld [vmem:[%s255 + $0x90] sm:$0xff]
      %v321 = vld [vmem:[%s255 + $0x98] sm:$0xff]
      %v322 = vld [vmem:[%s255 + $0xa0] sm:$0xff]
      %v323 = vld [vmem:[%s255 + $0xa8] sm:$0xff]
      %v324 = vld [vmem:[%s255 + $0xb0] sm:$0xff]
      %v325 = vld [vmem:[%s255 + $0xb8] sm:$0xff]
      %v326 = vld [vmem:[%s255 + $0xc0] sm:$0xff]
      %v327 = vld [vmem:[%s255 + $0xc8] sm:$0xff]
      %v328 = vld [vmem:[%s255 + $0xd0] sm:$0xff]
      %v329 = vld [vmem:[%s255 + $0xd8] sm:$0xff]
      %v330 = vld [vmem:[%s255 + $0xe0] sm:$0xff]
      %v331 = vld [vmem:[%s255 + $0xe8] sm:$0xff]
      %v332 = vld [vmem:[%s255 + $0xf0] sm:$0xff]
      %v333 = vld [vmem:[%s255 + $0xf8] sm:$0xff]
      %v334 = vld [vmem:[%s237] sm:$0xf]
      %v335 = vld [vmem:[%s237 + $0x4] sm:$0xf]
      %v336 = vld [vmem:[%s237 + $0x8] sm:$0xf]
      %v337 = vld [vmem:[%s237 + $0xc] sm:$0xf]
      %v338 = vld [vmem:[%s237 + $0x10] sm:$0xf]
      %v339 = vld [vmem:[%s237 + $0x14] sm:$0xf]
      %v340 = vld [vmem:[%s237 + $0x18] sm:$0xf]
      %v341 = vld [vmem:[%s237 + $0x1c] sm:$0xf]
      %v342 = vld [vmem:[%s237 + $0x20] sm:$0xf]
      %v343 = vld [vmem:[%s237 + $0x24] sm:$0xf]
      %v344 = vld [vmem:[%s237 + $0x28] sm:$0xf]
      %v345 = vld [vmem:[%s237 + $0x2c] sm:$0xf]
      %v346 = vld [vmem:[%s237 + $0x30] sm:$0xf]
      %v347 = vld [vmem:[%s237 + $0x34] sm:$0xf]
      %v348 = vld [vmem:[%s237 + $0x38] sm:$0xf]
      %v349 = vld [vmem:[%s237 + $0x3c] sm:$0xf]
      %v350 = vld [vmem:[%s237 + $0x40] sm:$0xf]
      %v351 = vld [vmem:[%s237 + $0x44] sm:$0xf]
      %v352 = vld [vmem:[%s237 + $0x48] sm:$0xf]
      %v353 = vld [vmem:[%s237 + $0x4c] sm:$0xf]
      %v354 = vld [vmem:[%s237 + $0x50] sm:$0xf]
      %v355 = vld [vmem:[%s237 + $0x54] sm:$0xf]
      %v356 = vld [vmem:[%s237 + $0x58] sm:$0xf]
      %v357 = vld [vmem:[%s237 + $0x5c] sm:$0xf]
      %v358 = vld [vmem:[%s237 + $0x60] sm:$0xf]
      %v359 = vld [vmem:[%s237 + $0x64] sm:$0xf]
      %v360 = vld [vmem:[%s237 + $0x68] sm:$0xf]
      %v361 = vld [vmem:[%s237 + $0x6c] sm:$0xf]
      %v362 = vld [vmem:[%s237 + $0x70] sm:$0xf]
      %v363 = vld [vmem:[%s237 + $0x74] sm:$0xf]
      %v364 = vld [vmem:[%s237 + $0x78] sm:$0xf]
      %v365 = vld [vmem:[%s237 + $0x7c] sm:$0xf]
      %v366 = vld [vmem:[%s246] sm:$0xf]
      %v367 = vld [vmem:[%s246 + $0x4] sm:$0xf]
      %v368 = vld [vmem:[%s246 + $0x8] sm:$0xf]
      %v369 = vld [vmem:[%s246 + $0xc] sm:$0xf]
      %v370 = vld [vmem:[%s246 + $0x10] sm:$0xf]
      %v371 = vld [vmem:[%s246 + $0x14] sm:$0xf]
      %v372 = vld [vmem:[%s246 + $0x18] sm:$0xf]
      %v373 = vld [vmem:[%s246 + $0x1c] sm:$0xf]
      %v374 = vld [vmem:[%s246 + $0x20] sm:$0xf]
      %v375 = vld [vmem:[%s246 + $0x24] sm:$0xf]
      %v376 = vld [vmem:[%s246 + $0x28] sm:$0xf]
      %v377 = vld [vmem:[%s246 + $0x2c] sm:$0xf]
      %v378 = vld [vmem:[%s246 + $0x30] sm:$0xf]
      %v379 = vld [vmem:[%s246 + $0x34] sm:$0xf]
      %v380 = vld [vmem:[%s246 + $0x38] sm:$0xf]
      %v381 = vld [vmem:[%s246 + $0x3c] sm:$0xf]
      %v414 = vunpack.c.l.b16 %v334
      %v415 = vunpack.c.l.b16 %v335
      %v416 = vunpack.c.l.b16 %v336
      %v417 = vunpack.c.l.b16 %v337
      %v418 = vunpack.c.l.b16 %v338
      %v419 = vunpack.c.l.b16 %v339
      %v420 = vunpack.c.l.b16 %v340
      %v421 = vunpack.c.l.b16 %v341
      %v422 = vunpack.c.l.b16 %v342
      %v423 = vunpack.c.l.b16 %v343
      %v424 = vunpack.c.l.b16 %v344
      %v425 = vunpack.c.l.b16 %v345
      %v426 = vunpack.c.l.b16 %v346
      %v427 = vunpack.c.l.b16 %v347
      %v428 = vunpack.c.l.b16 %v348
      %v429 = vunpack.c.l.b16 %v349
      %v430 = vunpack.c.l.b16 %v350
      %v431 = vunpack.c.l.b16 %v351
      %v432 = vunpack.c.l.b16 %v352
      %v433 = vunpack.c.l.b16 %v353
      %v434 = vunpack.c.l.b16 %v354
      %v435 = vunpack.c.l.b16 %v355
      %v436 = vunpack.c.l.b16 %v356
      %v437 = vunpack.c.l.b16 %v357
      %v438 = vunpack.c.l.b16 %v358
      %v439 = vunpack.c.l.b16 %v359
      %v440 = vunpack.c.l.b16 %v360
      %v441 = vunpack.c.l.b16 %v361
      %v442 = vunpack.c.l.b16 %v362
      %v443 = vunpack.c.l.b16 %v363
      %v444 = vunpack.c.l.b16 %v364
      %v445 = vunpack.c.l.b16 %v365
      %v446 = vpack.c.b16 %v415, %v414
      %v447 = vpack.c.b16 %v417, %v416
      %v448 = vpack.c.b16 %v419, %v418
      %v449 = vpack.c.b16 %v421, %v420
      %v450 = vpack.c.b16 %v423, %v422
      %v451 = vpack.c.b16 %v425, %v424
      %v452 = vpack.c.b16 %v427, %v426
      %v453 = vpack.c.b16 %v429, %v428
      %v454 = vpack.c.b16 %v431, %v430
      %v455 = vpack.c.b16 %v433, %v432
      %v456 = vpack.c.b16 %v435, %v434
      %v457 = vpack.c.b16 %v437, %v436
      %v458 = vpack.c.b16 %v439, %v438
      %v459 = vpack.c.b16 %v441, %v440
      %v460 = vpack.c.b16 %v443, %v442
      %v461 = vpack.c.b16 %v445, %v444
      %v494 = vunpack.c.l.b16 %v366
      %v495 = vunpack.c.l.b16 %v367
      %v496 = vunpack.c.l.b16 %v368
      %v497 = vunpack.c.l.b16 %v369
      %v498 = vunpack.c.l.b16 %v370
      %v499 = vunpack.c.l.b16 %v371
      %v500 = vunpack.c.l.b16 %v372
      %v501 = vunpack.c.l.b16 %v373
      %v502 = vunpack.c.l.b16 %v374
      %v503 = vunpack.c.l.b16 %v375
      %v504 = vunpack.c.l.b16 %v376
      %v505 = vunpack.c.l.b16 %v377
      %v506 = vunpack.c.l.b16 %v378
      %v507 = vunpack.c.l.b16 %v379
      %v508 = vunpack.c.l.b16 %v380
      %v509 = vunpack.c.l.b16 %v381
      %v510 = vpack.c.b16 %v495, %v494
      %v511 = vpack.c.b16 %v497, %v496
      %v512 = vpack.c.b16 %v499, %v498
      %v513 = vpack.c.b16 %v501, %v500
      %v514 = vpack.c.b16 %v503, %v502
      %v515 = vpack.c.b16 %v505, %v504
      %v516 = vpack.c.b16 %v507, %v506
      %v517 = vpack.c.b16 %v509, %v508
      %526 = vmatprep.subr.bf16.mxu0 0
      %527 = vmatpush1.bf16.msra.mxu0 %v517
      %528 = vmatprep.subr.bf16.mxu0 0
      %529 = vmatpush1.bf16.msra.mxu0 %v516
      %530 = vmatprep.subr.bf16.mxu0 0
      %531 = vmatpush1.bf16.msra.mxu0 %v515
      %532 = vmatprep.subr.bf16.mxu0 0
      %533 = vmatpush1.bf16.msra.mxu0 %v514
      %534 = vmatprep.subr.bf16.mxu0 0
      %535 = vmatpush1.bf16.msra.mxu0 %v513
      %536 = vmatprep.subr.bf16.mxu0 0
      %537 = vmatpush1.bf16.msra.mxu0 %v512
      %538 = vmatprep.subr.bf16.mxu0 0
      %539 = vmatpush1.bf16.msra.mxu0 %v511
      %540 = vmatprep.subr.bf16.mxu0 0
      %541 = vmatpush1.bf16.msra.mxu0 %v510
      %542 = vmatprep.subr.bf16.mxu0 0
      %543 = vmatpush2.bf16.msra.mxu0 0
      %544 = vmatprep.subr.bf16.mxu0 0
      %545 = vmatpush2.bf16.msra.mxu0 0
      %546 = vmatprep.subr.bf16.mxu0 0
      %547 = vmatpush2.bf16.msra.mxu0 0
      %548 = vmatprep.subr.bf16.mxu0 0
      %549 = vmatpush2.bf16.msra.mxu0 0
      %550 = vmatprep.subr.bf16.mxu0 0
      %551 = vmatpush2.bf16.msra.mxu0 0
      %552 = vmatprep.subr.bf16.mxu0 0
      %553 = vmatpush2.bf16.msra.mxu0 0
      %554 = vmatprep.subr.bf16.mxu0 0
      %555 = vmatpush2.bf16.msra.mxu0 0
      %556 = vmatprep.subr.bf16.mxu0 0
      %557 = vmatpush2.bf16.msra.mxu0 0
      %558 = vmatprep.mubr.bf16.mxu0 0
      %559 = vmatmul.mubr.bf16.gmra.mxu0 %v446
      %v560 = vpop.f32.mrf.mxu0
      %v561 = vadd.f32 0.0, %v560
      %v562 = vpop.f32.mrf.mxu0
      %v563 = vpop.f32.mrf.mxu0
      %v564 = vadd.f32 0.0, %v563
      %v565 = vpop.f32.mrf.mxu0
      %566 = vmatprep.mubr.bf16.mxu0 0
      %567 = vmatmul.mubr.bf16.gmra.mxu0 %v447
      %v568 = vpop.f32.mrf.mxu0
      %v569 = vadd.f32 0.0, %v568
      %v570 = vpop.f32.mrf.mxu0
      %v571 = vpop.f32.mrf.mxu0
      %v572 = vadd.f32 0.0, %v571
      %v573 = vpop.f32.mrf.mxu0
      %574 = vmatprep.mubr.bf16.mxu0 0
      %575 = vmatmul.mubr.bf16.gmra.mxu0 %v448
      %v576 = vpop.f32.mrf.mxu0
      %v577 = vadd.f32 0.0, %v576
      %v578 = vpop.f32.mrf.mxu0
      %v579 = vpop.f32.mrf.mxu0
      %v580 = vadd.f32 0.0, %v579
      %v581 = vpop.f32.mrf.mxu0
      %582 = vmatprep.mubr.bf16.mxu0 0
      %583 = vmatmul.mubr.bf16.gmra.mxu0 %v449
      %v584 = vpop.f32.mrf.mxu0
      %v585 = vadd.f32 0.0, %v584
      %v586 = vpop.f32.mrf.mxu0
      %v587 = vpop.f32.mrf.mxu0
      %v588 = vadd.f32 0.0, %v587
      %v589 = vpop.f32.mrf.mxu0
      %590 = vmatprep.mubr.bf16.mxu0 0
      %591 = vmatmul.mubr.bf16.gmra.mxu0 %v450
      %v592 = vpop.f32.mrf.mxu0
      %v593 = vadd.f32 0.0, %v592
      %v594 = vpop.f32.mrf.mxu0
      %v595 = vpop.f32.mrf.mxu0
      %v596 = vadd.f32 0.0, %v595
      %v597 = vpop.f32.mrf.mxu0
      %598 = vmatprep.mubr.bf16.mxu0 0
      %599 = vmatmul.mubr.bf16.gmra.mxu0 %v451
      %v600 = vpop.f32.mrf.mxu0
      %v601 = vadd.f32 0.0, %v600
      %v602 = vpop.f32.mrf.mxu0
      %v603 = vpop.f32.mrf.mxu0
      %v604 = vadd.f32 0.0, %v603
      %v605 = vpop.f32.mrf.mxu0
      %606 = vmatprep.mubr.bf16.mxu0 0
      %607 = vmatmul.mubr.bf16.gmra.mxu0 %v452
      %v608 = vpop.f32.mrf.mxu0
      %v609 = vadd.f32 0.0, %v608
      %v610 = vpop.f32.mrf.mxu0
      %v611 = vpop.f32.mrf.mxu0
      %v612 = vadd.f32 0.0, %v611
      %v613 = vpop.f32.mrf.mxu0
      %614 = vmatprep.mubr.bf16.mxu0 0
      %615 = vmatmul.mubr.bf16.gmra.mxu0 %v453
      %v616 = vpop.f32.mrf.mxu0
      %v617 = vadd.f32 0.0, %v616
      %v618 = vpop.f32.mrf.mxu0
      %v619 = vpop.f32.mrf.mxu0
      %v620 = vadd.f32 0.0, %v619
      %v621 = vpop.f32.mrf.mxu0
      %622 = vmatprep.mubr.bf16.mxu0 0
      %623 = vmatmul.mubr.bf16.gmra.mxu0 %v454
      %v624 = vpop.f32.mrf.mxu0
      %v625 = vadd.f32 0.0, %v624
      %v626 = vpop.f32.mrf.mxu0
      %v627 = vpop.f32.mrf.mxu0
      %v628 = vadd.f32 0.0, %v627
      %v629 = vpop.f32.mrf.mxu0
      %630 = vmatprep.mubr.bf16.mxu0 0
      %631 = vmatmul.mubr.bf16.gmra.mxu0 %v455
      %v632 = vpop.f32.mrf.mxu0
      %v633 = vadd.f32 0.0, %v632
      %v634 = vpop.f32.mrf.mxu0
      %v635 = vpop.f32.mrf.mxu0
      %v636 = vadd.f32 0.0, %v635
      %v637 = vpop.f32.mrf.mxu0
      %638 = vmatprep.mubr.bf16.mxu0 0
      %639 = vmatmul.mubr.bf16.gmra.mxu0 %v456
      %v640 = vpop.f32.mrf.mxu0
      %v641 = vadd.f32 0.0, %v640
      %v642 = vpop.f32.mrf.mxu0
      %v643 = vpop.f32.mrf.mxu0
      %v644 = vadd.f32 0.0, %v643
      %v645 = vpop.f32.mrf.mxu0
      %646 = vmatprep.mubr.bf16.mxu0 0
      %647 = vmatmul.mubr.bf16.gmra.mxu0 %v457
      %v648 = vpop.f32.mrf.mxu0
      %v649 = vadd.f32 0.0, %v648
      %v650 = vpop.f32.mrf.mxu0
      %v651 = vpop.f32.mrf.mxu0
      %v652 = vadd.f32 0.0, %v651
      %v653 = vpop.f32.mrf.mxu0
      %654 = vmatprep.mubr.bf16.mxu0 0
      %655 = vmatmul.mubr.bf16.gmra.mxu0 %v458
      %v656 = vpop.f32.mrf.mxu0
      %v657 = vadd.f32 0.0, %v656
      %v658 = vpop.f32.mrf.mxu0
      %v659 = vpop.f32.mrf.mxu0
      %v660 = vadd.f32 0.0, %v659
      %v661 = vpop.f32.mrf.mxu0
      %662 = vmatprep.mubr.bf16.mxu0 0
      %663 = vmatmul.mubr.bf16.gmra.mxu0 %v459
      %v664 = vpop.f32.mrf.mxu0
      %v665 = vadd.f32 0.0, %v664
      %v666 = vpop.f32.mrf.mxu0
      %v667 = vpop.f32.mrf.mxu0
      %v668 = vadd.f32 0.0, %v667
      %v669 = vpop.f32.mrf.mxu0
      %670 = vmatprep.mubr.bf16.mxu0 0
      %671 = vmatmul.mubr.bf16.gmra.mxu0 %v460
      %v672 = vpop.f32.mrf.mxu0
      %v673 = vadd.f32 0.0, %v672
      %v674 = vpop.f32.mrf.mxu0
      %v675 = vpop.f32.mrf.mxu0
      %v676 = vadd.f32 0.0, %v675
      %v677 = vpop.f32.mrf.mxu0
      %678 = vmatprep.mubr.bf16.mxu0 0
      %679 = vmatmul.mubr.bf16.gmra.mxu0 %v461
      %v680 = vpop.f32.mrf.mxu0
      %v681 = vadd.f32 0.0, %v680
      %v682 = vpop.f32.mrf.mxu0
      %v683 = vpop.f32.mrf.mxu0
      %v684 = vadd.f32 0.0, %v683
      %v685 = vpop.f32.mrf.mxu0
      %686 = vdwg.mxu0
      %v687 = vadd.f32 %v302, %v561
      %v688 = vadd.f32 %v303, %v564
      %v689 = vadd.f32 %v304, %v569
      %v690 = vadd.f32 %v305, %v572
      %v691 = vadd.f32 %v306, %v577
      %v692 = vadd.f32 %v307, %v580
      %v693 = vadd.f32 %v308, %v585
      %v694 = vadd.f32 %v309, %v588
      %v695 = vadd.f32 %v310, %v593
      %v696 = vadd.f32 %v311, %v596
      %v697 = vadd.f32 %v312, %v601
      %v698 = vadd.f32 %v313, %v604
      %v699 = vadd.f32 %v314, %v609
      %v700 = vadd.f32 %v315, %v612
      %v701 = vadd.f32 %v316, %v617
      %v702 = vadd.f32 %v317, %v620
      %v703 = vadd.f32 %v318, %v625
      %v704 = vadd.f32 %v319, %v628
      %v705 = vadd.f32 %v320, %v633
      %v706 = vadd.f32 %v321, %v636
      %v707 = vadd.f32 %v322, %v641
      %v708 = vadd.f32 %v323, %v644
      %v709 = vadd.f32 %v324, %v649
      %v710 = vadd.f32 %v325, %v652
      %v711 = vadd.f32 %v326, %v657
      %v712 = vadd.f32 %v327, %v660
      %v713 = vadd.f32 %v328, %v665
      %v714 = vadd.f32 %v329, %v668
      %v715 = vadd.f32 %v330, %v673
      %v716 = vadd.f32 %v331, %v676
      %v717 = vadd.f32 %v332, %v681
      %v718 = vadd.f32 %v333, %v684
      %719 = vst [vmem:[%s255] sm:$0xff] %v687
      %720 = vst [vmem:[%s255 + $0x8] sm:$0xff] %v688
      %721 = vst [vmem:[%s255 + $0x10] sm:$0xff] %v689
      %722 = vst [vmem:[%s255 + $0x18] sm:$0xff] %v690
      %723 = vst [vmem:[%s255 + $0x20] sm:$0xff] %v691
      %724 = vst [vmem:[%s255 + $0x28] sm:$0xff] %v692
      %725 = vst [vmem:[%s255 + $0x30] sm:$0xff] %v693
      %726 = vst [vmem:[%s255 + $0x38] sm:$0xff] %v694
      %727 = vst [vmem:[%s255 + $0x40] sm:$0xff] %v695
      %728 = vst [vmem:[%s255 + $0x48] sm:$0xff] %v696
      %729 = vst [vmem:[%s255 + $0x50] sm:$0xff] %v697
      %730 = vst [vmem:[%s255 + $0x58] sm:$0xff] %v698
      %731 = vst [vmem:[%s255 + $0x60] sm:$0xff] %v699
      %732 = vst [vmem:[%s255 + $0x68] sm:$0xff] %v700
      %733 = vst [vmem:[%s255 + $0x70] sm:$0xff] %v701
      %734 = vst [vmem:[%s255 + $0x78] sm:$0xff] %v702
      %735 = vst [vmem:[%s255 + $0x80] sm:$0xff] %v703
      %736 = vst [vmem:[%s255 + $0x88] sm:$0xff] %v704
      %737 = vst [vmem:[%s255 + $0x90] sm:$0xff] %v705
      %738 = vst [vmem:[%s255 + $0x98] sm:$0xff] %v706
      %739 = vst [vmem:[%s255 + $0xa0] sm:$0xff] %v707
      %740 = vst [vmem:[%s255 + $0xa8] sm:$0xff] %v708
      %741 = vst [vmem:[%s255 + $0xb0] sm:$0xff] %v709
      %742 = vst [vmem:[%s255 + $0xb8] sm:$0xff] %v710
      %743 = vst [vmem:[%s255 + $0xc0] sm:$0xff] %v711
      %744 = vst [vmem:[%s255 + $0xc8] sm:$0xff] %v712
      %745 = vst [vmem:[%s255 + $0xd0] sm:$0xff] %v713
      %746 = vst [vmem:[%s255 + $0xd8] sm:$0xff] %v714
      %747 = vst [vmem:[%s255 + $0xe0] sm:$0xff] %v715
      %748 = vst [vmem:[%s255 + $0xe8] sm:$0xff] %v716
      %749 = vst [vmem:[%s255 + $0xf0] sm:$0xff] %v717
      %750 = vst [vmem:[%s255 + $0xf8] sm:$0xff] %v718
      // Predicated region
      $region33: #{conv_bn_leakyrelu_nhwc.2} parent=27 // pred_check
        %p751 = pneg %p265
      $region34: #{conv_bn_leakyrelu_nhwc.2} parent=27 // pred_check_branch
        %753 = sbr.rel (%p751) target = $region36
      $region35: #{conv_bn_leakyrelu_nhwc.2} parent=27 // pred_region
        %v754 = vld [vmem:[%s255] sm:$0xff]
        %v755 = vld [vmem:[%s255 + $0x8] sm:$0xff]
        %v756 = vld [vmem:[%s255 + $0x10] sm:$0xff]
        %v757 = vld [vmem:[%s255 + $0x18] sm:$0xff]
        %v758 = vld [vmem:[%s255 + $0x20] sm:$0xff]
        %v759 = vld [vmem:[%s255 + $0x28] sm:$0xff]
        %v760 = vld [vmem:[%s255 + $0x30] sm:$0xff]
        %v761 = vld [vmem:[%s255 + $0x38] sm:$0xff]
        %v762 = vld [vmem:[%s255 + $0x40] sm:$0xff]
        %v763 = vld [vmem:[%s255 + $0x48] sm:$0xff]
        %v764 = vld [vmem:[%s255 + $0x50] sm:$0xff]
        %v765 = vld [vmem:[%s255 + $0x58] sm:$0xff]
        %v766 = vld [vmem:[%s255 + $0x60] sm:$0xff]
        %v767 = vld [vmem:[%s255 + $0x68] sm:$0xff]
        %v768 = vld [vmem:[%s255 + $0x70] sm:$0xff]
        %v769 = vld [vmem:[%s255 + $0x78] sm:$0xff]
        %v770 = vld [vmem:[%s255 + $0x80] sm:$0xff]
        %v771 = vld [vmem:[%s255 + $0x88] sm:$0xff]
        %v772 = vld [vmem:[%s255 + $0x90] sm:$0xff]
        %v773 = vld [vmem:[%s255 + $0x98] sm:$0xff]
        %v774 = vld [vmem:[%s255 + $0xa0] sm:$0xff]
        %v775 = vld [vmem:[%s255 + $0xa8] sm:$0xff]
        %v776 = vld [vmem:[%s255 + $0xb0] sm:$0xff]
        %v777 = vld [vmem:[%s255 + $0xb8] sm:$0xff]
        %v778 = vld [vmem:[%s255 + $0xc0] sm:$0xff]
        %v779 = vld [vmem:[%s255 + $0xc8] sm:$0xff]
        %v780 = vld [vmem:[%s255 + $0xd0] sm:$0xff]
        %v781 = vld [vmem:[%s255 + $0xd8] sm:$0xff]
        %v782 = vld [vmem:[%s255 + $0xe0] sm:$0xff]
        %v783 = vld [vmem:[%s255 + $0xe8] sm:$0xff]
        %v784 = vld [vmem:[%s255 + $0xf0] sm:$0xff]
        %v785 = vld [vmem:[%s255 + $0xf8] sm:$0xff]
        %v786 = vadd.f32 %v754, %v755
        %v787 = vadd.f32 %v786, %v756
        %v788 = vadd.f32 %v787, %v757
        %v789 = vadd.f32 %v788, %v758
        %v790 = vadd.f32 %v789, %v759
        %v791 = vadd.f32 %v790, %v760
        %v792 = vadd.f32 %v791, %v761
        %v793 = vadd.f32 %v792, %v762
        %v794 = vadd.f32 %v793, %v763
        %v795 = vadd.f32 %v794, %v764
        %v796 = vadd.f32 %v795, %v765
        %v797 = vadd.f32 %v796, %v766
        %v798 = vadd.f32 %v797, %v767
        %v799 = vadd.f32 %v798, %v768
        %v800 = vadd.f32 %v799, %v769
        %v801 = vadd.f32 %v800, %v770
        %v802 = vadd.f32 %v801, %v771
        %v803 = vadd.f32 %v802, %v772
        %v804 = vadd.f32 %v803, %v773
        %v805 = vadd.f32 %v804, %v774
        %v806 = vadd.f32 %v805, %v775
        %v807 = vadd.f32 %v806, %v776
        %v808 = vadd.f32 %v807, %v777
        %v809 = vadd.f32 %v808, %v778
        %v810 = vadd.f32 %v809, %v779
        %v811 = vadd.f32 %v810, %v780
        %v812 = vadd.f32 %v811, %v781
        %v813 = vadd.f32 %v812, %v782
        %v814 = vadd.f32 %v813, %v783
        %v815 = vadd.f32 %v814, %v784
        %v816 = vadd.f32 %v815, %v785
        %v817 = vrot.slane %v816, 4
        %v818 = vadd.f32 %v816, %v817
        %v819 = vrot.slane %v818, 2
        %v820 = vadd.f32 %v818, %v819
        %v821 = vrot.slane %v820, 1
        %v822 = vadd.f32 %v820, %v821
        %823 = vst [vmem:[%s263] sm:$0x1] %v822
        %v824 = vmul.f32 %v754, %v754
        %v825 = vmul.f32 %v755, %v755
        %v826 = vmul.f32 %v756, %v756
        %v827 = vmul.f32 %v757, %v757
        %v828 = vmul.f32 %v758, %v758
        %v829 = vmul.f32 %v759, %v759
        %v830 = vmul.f32 %v760, %v760
        %v831 = vmul.f32 %v761, %v761
        %v832 = vmul.f32 %v762, %v762
        %v833 = vmul.f32 %v763, %v763
        %v834 = vmul.f32 %v764, %v764
        %v835 = vmul.f32 %v765, %v765
        %v836 = vmul.f32 %v766, %v766
        %v837 = vmul.f32 %v767, %v767
        %v838 = vmul.f32 %v768, %v768
        %v839 = vmul.f32 %v769, %v769
        %v840 = vmul.f32 %v770, %v770
        %v841 = vmul.f32 %v771, %v771
        %v842 = vmul.f32 %v772, %v772
        %v843 = vmul.f32 %v773, %v773
        %v844 = vmul.f32 %v774, %v774
        %v845 = vmul.f32 %v775, %v775
        %v846 = vmul.f32 %v776, %v776
        %v847 = vmul.f32 %v777, %v777
        %v848 = vmul.f32 %v778, %v778
        %v849 = vmul.f32 %v779, %v779
        %v850 = vmul.f32 %v780, %v780
        %v851 = vmul.f32 %v781, %v781
        %v852 = vmul.f32 %v782, %v782
        %v853 = vmul.f32 %v783, %v783
        %v854 = vmul.f32 %v784, %v784
        %v855 = vmul.f32 %v785, %v785
        %v856 = vadd.f32 %v824, %v825
        %v857 = vadd.f32 %v856, %v826
        %v858 = vadd.f32 %v857, %v827
        %v859 = vadd.f32 %v858, %v828
        %v860 = vadd.f32 %v859, %v829
        %v861 = vadd.f32 %v860, %v830
        %v862 = vadd.f32 %v861, %v831
        %v863 = vadd.f32 %v862, %v832
        %v864 = vadd.f32 %v863, %v833
        %v865 = vadd.f32 %v864, %v834
        %v866 = vadd.f32 %v865, %v835
        %v867 = vadd.f32 %v866, %v836
        %v868 = vadd.f32 %v867, %v837
        %v869 = vadd.f32 %v868, %v838
        %v870 = vadd.f32 %v869, %v839
        %v871 = vadd.f32 %v870, %v840
        %v872 = vadd.f32 %v871, %v841
        %v873 = vadd.f32 %v872, %v842
        %v874 = vadd.f32 %v873, %v843
        %v875 = vadd.f32 %v874, %v844
        %v876 = vadd.f32 %v875, %v845
        %v877 = vadd.f32 %v876, %v846
        %v878 = vadd.f32 %v877, %v847
        %v879 = vadd.f32 %v878, %v848
        %v880 = vadd.f32 %v879, %v849
        %v881 = vadd.f32 %v880, %v850
        %v882 = vadd.f32 %v881, %v851
        %v883 = vadd.f32 %v882, %v852
        %v884 = vadd.f32 %v883, %v853
        %v885 = vadd.f32 %v884, %v854
        %v886 = vadd.f32 %v885, %v855
        %v887 = vrot.slane %v886, 4
        %v888 = vadd.f32 %v886, %v887
        %v889 = vrot.slane %v888, 2
        %v890 = vadd.f32 %v888, %v889
        %v891 = vrot.slane %v890, 1
        %v892 = vadd.f32 %v890, %v891
        %893 = vst [vmem:[%s263 + $0x1] sm:$0x1] %v892
      $region36: #{conv_bn_leakyrelu_nhwc.2} parent=27 // pred_fallthru
        _
      %s894 = smul.u32 32, %s20
      %p895 = scmp.lt.s32.totalorder %s894, 63
      %s896 = scalar_select %p895, %s894, 63
      %p897 = scmp.lt.s32.totalorder %s21, 0
      %s898 = scalar_select %p897, %s21, 0
      %s899 = sadd.s32 %s898, %s896
      %s900 = smul.addr %s899, 8
      %s901 = scalar_lea.vmem %s2, %s900
      %p902 = scmp.lt.s32.totalorder %s20, 1
      %s903 = scalar_select %p902, %s20, 1
      %p904 = scmp.lt.s32.totalorder %s21, 0
      %s905 = scalar_select %p904, %s21, 0
      %s906 = sadd.s32 %s905, %s903
      %s907 = smul.addr %s906, 8
      %s908 = scalar_lea.vmem %s3, %s907
      // Predicated region
      $region37: #{conv_bn_leakyrelu_nhwc.2} parent=27 // pred_check
        %p909 = pneg %p110
      $region38: #{conv_bn_leakyrelu_nhwc.2} parent=27 // pred_check_branch
        %911 = sbr.rel (%p909) target = $region40
      $region39: #{conv_bn_leakyrelu_nhwc.2} parent=27 // pred_region
        %s912 = smul.u32 32, %s20
      $region40: #{conv_bn_leakyrelu_nhwc.2} parent=27 // pred_fallthru
        _
      // Predicated region
      $region41: #{conv_bn_leakyrelu_nhwc.2} parent=27 // pred_check
        %p913 = pneg %p138
      $region42: #{conv_bn_leakyrelu_nhwc.2} parent=27 // pred_check_branch
        %915 = sbr.rel (%p913) target = $region44
      $region43: #{conv_bn_leakyrelu_nhwc.2} parent=27 // pred_region
        _
      $region44: #{conv_bn_leakyrelu_nhwc.2} parent=27 // pred_fallthru
        _
    $region28: #{conv_bn_leakyrelu_nhwc.2} parent=5 // pred_fallthru
      _
    %p916 = scmp.le.s32.totalorder 2, %s10
    // Predicated region
    $region45: #{conv_bn_leakyrelu_nhwc.2} parent=5 // pred_check
      %p917 = pneg %p916
    $region46: #{conv_bn_leakyrelu_nhwc.2} parent=5 // pred_check_branch
      %919 = sbr.rel (%p917) target = $region48
    $region47: #{conv_bn_leakyrelu_nhwc.2} parent=5 // pred_region
      %s920 = ssub.s32 %s10, 2
      // Predicated region
      $region49: #{conv_bn_leakyrelu_nhwc.2} parent=47 // pred_check
        %p921 = pneg %p116
      $region50: #{conv_bn_leakyrelu_nhwc.2} parent=47 // pred_check_branch
        %923 = sbr.rel (%p921) target = $region52
      $region51: #{conv_bn_leakyrelu_nhwc.2} parent=47 // pred_region
        %s924 = smul.u32 32, %s23
        %p925 = scmp.lt.s32.totalorder %s924, 63
        %s926 = scalar_select %p925, %s924, 63
        %p927 = scmp.lt.s32.totalorder %s24, 0
        %s928 = scalar_select %p927, %s24, 0
        %s929 = sadd.s32 %s928, %s926
        %s930 = smul.addr %s929, 8
        %s931 = scalar_lea.vmem %s2, %s930
      $region52: #{conv_bn_leakyrelu_nhwc.2} parent=47 // pred_fallthru
        _
      // Predicated region
      $region53: #{conv_bn_leakyrelu_nhwc.2} parent=47 // pred_check
        %p932 = pneg %p144
      $region54: #{conv_bn_leakyrelu_nhwc.2} parent=47 // pred_check_branch
        %934 = sbr.rel (%p932) target = $region56
      $region55: #{conv_bn_leakyrelu_nhwc.2} parent=47 // pred_region
        %p935 = scmp.lt.s32.totalorder %s23, 1
        %s936 = scalar_select %p935, %s23, 1
        %p937 = scmp.lt.s32.totalorder %s24, 0
        %s938 = scalar_select %p937, %s24, 0
        %s939 = sadd.s32 %s938, %s936
        %s940 = smul.addr %s939, 8
        %s941 = scalar_lea.vmem %s3, %s940
      $region56: #{conv_bn_leakyrelu_nhwc.2} parent=47 // pred_fallthru
        _
    $region48: #{conv_bn_leakyrelu_nhwc.2} parent=5 // pred_fallthru
      _
  $region6: #{conv_bn_leakyrelu_nhwc.2} parent=0 // loop_footer
    %s14 = sadd.s32 1, %s10
  $region7: #{conv_bn_leakyrelu_nhwc.2} parent=0 // loop_footer_branch
    %9 = sbr.rel target = $region3
  $region8: #{conv_bn_leakyrelu_nhwc.2} parent=0 // loop_exit
    _

// kernel: conv_bn_leakyrelu_nhwc.3
$region0: #{conv_bn_leakyrelu_nhwc.3}
  #allocation0 [shape = 'u32[]', space=smem, size = 0x4, offset = 0x4, fixed_abs, tag = 'smem constant byte address 0x4 - core index']
  #allocation1 [shape = 'u32[144,128]{1,0:T(1,128)}', space=vmem, size = 0x12000, scoped, tag = 'internal scratch']
  %s0 = inlined_call_operand.vmem [shape: f32[512,128], index: 0, kind: input, shape index: {}]
  %s1 = inlined_call_operand.vmem [shape: f32[1,128], index: 1, kind: input, shape index: {}]
  %s2 = inlined_call_operand.vmem [shape: f32[1,128], index: 2, kind: input, shape index: {}]
  %s3 = inlined_call_operand.vmem [shape: bf16[512,128], index: 3, kind: output, shape index: {}]
  %s4 = sld [smem:[#allocation0]]
  $region22: #{conv_bn_leakyrelu_nhwc.3} parent=0
    _
  %s6 = ssub.s32 1, %s4
  %s7 = scalar_select 0, %s6, %s4
  // Predicated region
  $region2: #{conv_bn_leakyrelu_nhwc.3} parent=0 // pred_check
    _
  $region3: #{conv_bn_leakyrelu_nhwc.3} parent=0 // pred_check_branch
    %9 = sbr.rel (0) target = $region5
  $region4: #{conv_bn_leakyrelu_nhwc.3} parent=0 // pred_region
    _
  $region5: #{conv_bn_leakyrelu_nhwc.3} parent=0 // pred_fallthru
    _
  // Predicated region
  $region6: #{conv_bn_leakyrelu_nhwc.3} parent=0 // pred_check
    _
  $region7: #{conv_bn_leakyrelu_nhwc.3} parent=0 // pred_check_branch
    %11 = sbr.rel (0) target = $region9
  $region8: #{conv_bn_leakyrelu_nhwc.3} parent=0 // pred_region
    _
  $region9: #{conv_bn_leakyrelu_nhwc.3} parent=0 // pred_fallthru
    _
  // Predicated region
  $region10: #{conv_bn_leakyrelu_nhwc.3} parent=0 // pred_check
    _
  $region11: #{conv_bn_leakyrelu_nhwc.3} parent=0 // pred_check_branch
    %13 = sbr.rel (0) target = $region13
  $region12: #{conv_bn_leakyrelu_nhwc.3} parent=0 // pred_region
    _
  $region13: #{conv_bn_leakyrelu_nhwc.3} parent=0 // pred_fallthru
    _
  %v14 = vld [vmem:[%s0] sm:$0xff]
  %v15 = vld [vmem:[%s0 + $0x8] sm:$0xff]
  %v16 = vld [vmem:[%s0 + $0x10] sm:$0xff]
  %v17 = vld [vmem:[%s0 + $0x18] sm:$0xff]
  %v18 = vld [vmem:[%s0 + $0x20] sm:$0xff]
  %v19 = vld [vmem:[%s0 + $0x28] sm:$0xff]
  %v20 = vld [vmem:[%s0 + $0x30] sm:$0xff]
  %v21 = vld [vmem:[%s0 + $0x38] sm:$0xff]
  %v22 = vld [vmem:[%s0 + $0x40] sm:$0xff]
  %v23 = vld [vmem:[%s0 + $0x48] sm:$0xff]
  %v24 = vld [vmem:[%s0 + $0x50] sm:$0xff]
  %v25 = vld [vmem:[%s0 + $0x58] sm:$0xff]
  %v26 = vld [vmem:[%s0 + $0x60] sm:$0xff]
  %v27 = vld [vmem:[%s0 + $0x68] sm:$0xff]
  %v28 = vld [vmem:[%s0 + $0x70] sm:$0xff]
  %v29 = vld [vmem:[%s0 + $0x78] sm:$0xff]
  %v30 = vld [vmem:[%s0 + $0x80] sm:$0xff]
  %v31 = vld [vmem:[%s0 + $0x88] sm:$0xff]
  %v32 = vld [vmem:[%s0 + $0x90] sm:$0xff]
  %v33 = vld [vmem:[%s0 + $0x98] sm:$0xff]
  %v34 = vld [vmem:[%s0 + $0xa0] sm:$0xff]
  %v35 = vld [vmem:[%s0 + $0xa8] sm:$0xff]
  %v36 = vld [vmem:[%s0 + $0xb0] sm:$0xff]
  %v37 = vld [vmem:[%s0 + $0xb8] sm:$0xff]
  %v38 = vld [vmem:[%s0 + $0xc0] sm:$0xff]
  %v39 = vld [vmem:[%s0 + $0xc8] sm:$0xff]
  %v40 = vld [vmem:[%s0 + $0xd0] sm:$0xff]
  %v41 = vld [vmem:[%s0 + $0xd8] sm:$0xff]
  %v42 = vld [vmem:[%s0 + $0xe0] sm:$0xff]
  %v43 = vld [vmem:[%s0 + $0xe8] sm:$0xff]
  %v44 = vld [vmem:[%s0 + $0xf0] sm:$0xff]
  %v45 = vld [vmem:[%s0 + $0xf8] sm:$0xff]
  %v46 = vld [vmem:[%s0 + $0x100] sm:$0xff]
  %v47 = vld [vmem:[%s0 + $0x108] sm:$0xff]
  %v48 = vld [vmem:[%s0 + $0x110] sm:$0xff]
  %v49 = vld [vmem:[%s0 + $0x118] sm:$0xff]
  %v50 = vld [vmem:[%s0 + $0x120] sm:$0xff]
  %v51 = vld [vmem:[%s0 + $0x128] sm:$0xff]
  %v52 = vld [vmem:[%s0 + $0x130] sm:$0xff]
  %v53 = vld [vmem:[%s0 + $0x138] sm:$0xff]
  %v54 = vld [vmem:[%s0 + $0x140] sm:$0xff]
  %v55 = vld [vmem:[%s0 + $0x148] sm:$0xff]
  %v56 = vld [vmem:[%s0 + $0x150] sm:$0xff]
  %v57 = vld [vmem:[%s0 + $0x158] sm:$0xff]
  %v58 = vld [vmem:[%s0 + $0x160] sm:$0xff]
  %v59 = vld [vmem:[%s0 + $0x168] sm:$0xff]
  %v60 = vld [vmem:[%s0 + $0x170] sm:$0xff]
  %v61 = vld [vmem:[%s0 + $0x178] sm:$0xff]
  %v62 = vld [vmem:[%s0 + $0x180] sm:$0xff]
  %v63 = vld [vmem:[%s0 + $0x188] sm:$0xff]
  %v64 = vld [vmem:[%s0 + $0x190] sm:$0xff]
  %v65 = vld [vmem:[%s0 + $0x198] sm:$0xff]
  %v66 = vld [vmem:[%s0 + $0x1a0] sm:$0xff]
  %v67 = vld [vmem:[%s0 + $0x1a8] sm:$0xff]
  %v68 = vld [vmem:[%s0 + $0x1b0] sm:$0xff]
  %v69 = vld [vmem:[%s0 + $0x1b8] sm:$0xff]
  %v70 = vld [vmem:[%s0 + $0x1c0] sm:$0xff]
  %v71 = vld [vmem:[%s0 + $0x1c8] sm:$0xff]
  %v72 = vld [vmem:[%s0 + $0x1d0] sm:$0xff]
  %v73 = vld [vmem:[%s0 + $0x1d8] sm:$0xff]
  %v74 = vld [vmem:[%s0 + $0x1e0] sm:$0xff]
  %v75 = vld [vmem:[%s0 + $0x1e8] sm:$0xff]
  %v76 = vld [vmem:[%s0 + $0x1f0] sm:$0xff]
  %v77 = vld [vmem:[%s0 + $0x1f8] sm:$0xff]
  %v78 = vld [vmem:[%s1] sm:$0x1]
  %v80 = vlaneseq
  %v81 = vshrl.u32 %v80, 7
  %v82 = vsub.s32 0, %v81
  %v83 = vrot.slane %v78, %v82
  %v85 = vmul.f32 %v14, %v83
  %v86 = vmul.f32 %v15, %v83
  %v87 = vmul.f32 %v16, %v83
  %v88 = vmul.f32 %v17, %v83
  %v89 = vmul.f32 %v18, %v83
  %v90 = vmul.f32 %v19, %v83
  %v91 = vmul.f32 %v20, %v83
  %v92 = vmul.f32 %v21, %v83
  %v93 = vmul.f32 %v22, %v83
  %v94 = vmul.f32 %v23, %v83
  %v95 = vmul.f32 %v24, %v83
  %v96 = vmul.f32 %v25, %v83
  %v97 = vmul.f32 %v26, %v83
  %v98 = vmul.f32 %v27, %v83
  %v99 = vmul.f32 %v28, %v83
  %v100 = vmul.f32 %v29, %v83
  %v101 = vmul.f32 %v30, %v83
  %v102 = vmul.f32 %v31, %v83
  %v103 = vmul.f32 %v32, %v83
  %v104 = vmul.f32 %v33, %v83
  %v105 = vmul.f32 %v34, %v83
  %v106 = vmul.f32 %v35, %v83
  %v107 = vmul.f32 %v36, %v83
  %v108 = vmul.f32 %v37, %v83
  %v109 = vmul.f32 %v38, %v83
  %v110 = vmul.f32 %v39, %v83
  %v111 = vmul.f32 %v40, %v83
  %v112 = vmul.f32 %v41, %v83
  %v113 = vmul.f32 %v42, %v83
  %v114 = vmul.f32 %v43, %v83
  %v115 = vmul.f32 %v44, %v83
  %v116 = vmul.f32 %v45, %v83
  %v117 = vmul.f32 %v46, %v83
  %v118 = vmul.f32 %v47, %v83
  %v119 = vmul.f32 %v48, %v83
  %v120 = vmul.f32 %v49, %v83
  %v121 = vmul.f32 %v50, %v83
  %v122 = vmul.f32 %v51, %v83
  %v123 = vmul.f32 %v52, %v83
  %v124 = vmul.f32 %v53, %v83
  %v125 = vmul.f32 %v54, %v83
  %v126 = vmul.f32 %v55, %v83
  %v127 = vmul.f32 %v56, %v83
  %v128 = vmul.f32 %v57, %v83
  %v129 = vmul.f32 %v58, %v83
  %v130 = vmul.f32 %v59, %v83
  %v131 = vmul.f32 %v60, %v83
  %v132 = vmul.f32 %v61, %v83
  %v133 = vmul.f32 %v62, %v83
  %v134 = vmul.f32 %v63, %v83
  %v135 = vmul.f32 %v64, %v83
  %v136 = vmul.f32 %v65, %v83
  %v137 = vmul.f32 %v66, %v83
  %v138 = vmul.f32 %v67, %v83
  %v139 = vmul.f32 %v68, %v83
  %v140 = vmul.f32 %v69, %v83
  %v141 = vmul.f32 %v70, %v83
  %v142 = vmul.f32 %v71, %v83
  %v143 = vmul.f32 %v72, %v83
  %v144 = vmul.f32 %v73, %v83
  %v145 = vmul.f32 %v74, %v83
  %v146 = vmul.f32 %v75, %v83
  %v147 = vmul.f32 %v76, %v83
  %v148 = vmul.f32 %v77, %v83
  %v149 = vld [vmem:[%s2] sm:$0x1]
  %v151 = vlaneseq
  %v152 = vshrl.u32 %v151, 7
  %v153 = vsub.s32 0, %v152
  %v154 = vrot.slane %v149, %v153
  %v156 = vadd.f32 %v85, %v154
  %v157 = vadd.f32 %v86, %v154
  %v158 = vadd.f32 %v87, %v154
  %v159 = vadd.f32 %v88, %v154
  %v160 = vadd.f32 %v89, %v154
  %v161 = vadd.f32 %v90, %v154
  %v162 = vadd.f32 %v91, %v154
  %v163 = vadd.f32 %v92, %v154
  %v164 = vadd.f32 %v93, %v154
  %v165 = vadd.f32 %v94, %v154
  %v166 = vadd.f32 %v95, %v154
  %v167 = vadd.f32 %v96, %v154
  %v168 = vadd.f32 %v97, %v154
  %v169 = vadd.f32 %v98, %v154
  %v170 = vadd.f32 %v99, %v154
  %v171 = vadd.f32 %v100, %v154
  %v172 = vadd.f32 %v101, %v154
  %v173 = vadd.f32 %v102, %v154
  %v174 = vadd.f32 %v103, %v154
  %v175 = vadd.f32 %v104, %v154
  %v176 = vadd.f32 %v105, %v154
  %v177 = vadd.f32 %v106, %v154
  %v178 = vadd.f32 %v107, %v154
  %v179 = vadd.f32 %v108, %v154
  %v180 = vadd.f32 %v109, %v154
  %v181 = vadd.f32 %v110, %v154
  %v182 = vadd.f32 %v111, %v154
  %v183 = vadd.f32 %v112, %v154
  %v184 = vadd.f32 %v113, %v154
  %v185 = vadd.f32 %v114, %v154
  %v186 = vadd.f32 %v115, %v154
  %v187 = vadd.f32 %v116, %v154
  %v188 = vadd.f32 %v117, %v154
  %v189 = vadd.f32 %v118, %v154
  %v190 = vadd.f32 %v119, %v154
  %v191 = vadd.f32 %v120, %v154
  %v192 = vadd.f32 %v121, %v154
  %v193 = vadd.f32 %v122, %v154
  %v194 = vadd.f32 %v123, %v154
  %v195 = vadd.f32 %v124, %v154
  %v196 = vadd.f32 %v125, %v154
  %v197 = vadd.f32 %v126, %v154
  %v198 = vadd.f32 %v127, %v154
  %v199 = vadd.f32 %v128, %v154
  %v200 = vadd.f32 %v129, %v154
  %v201 = vadd.f32 %v130, %v154
  %v202 = vadd.f32 %v131, %v154
  %v203 = vadd.f32 %v132, %v154
  %v204 = vadd.f32 %v133, %v154
  %v205 = vadd.f32 %v134, %v154
  %v206 = vadd.f32 %v135, %v154
  %v207 = vadd.f32 %v136, %v154
  %v208 = vadd.f32 %v137, %v154
  %v209 = vadd.f32 %v138, %v154
  %v210 = vadd.f32 %v139, %v154
  %v211 = vadd.f32 %v140, %v154
  %v212 = vadd.f32 %v141, %v154
  %v213 = vadd.f32 %v142, %v154
  %v214 = vadd.f32 %v143, %v154
  %v215 = vadd.f32 %v144, %v154
  %v216 = vadd.f32 %v145, %v154
  %v217 = vadd.f32 %v146, %v154
  %v218 = vadd.f32 %v147, %v154
  %v219 = vadd.f32 %v148, %v154
  %vm220 = vcmp.ge.f32.partialorder %v156, 0.0
  %vm221 = vcmp.ge.f32.partialorder %v157, 0.0
  %vm222 = vcmp.ge.f32.partialorder %v158, 0.0
  %vm223 = vcmp.ge.f32.partialorder %v159, 0.0
  %vm224 = vcmp.ge.f32.partialorder %v160, 0.0
  %vm225 = vcmp.ge.f32.partialorder %v161, 0.0
  %vm226 = vcmp.ge.f32.partialorder %v162, 0.0
  %vm227 = vcmp.ge.f32.partialorder %v163, 0.0
  %vm228 = vcmp.ge.f32.partialorder %v164, 0.0
  %vm229 = vcmp.ge.f32.partialorder %v165, 0.0
  %vm230 = vcmp.ge.f32.partialorder %v166, 0.0
  %vm231 = vcmp.ge.f32.partialorder %v167, 0.0
  %vm232 = vcmp.ge.f32.partialorder %v168, 0.0
  %vm233 = vcmp.ge.f32.partialorder %v169, 0.0
  %vm234 = vcmp.ge.f32.partialorder %v170, 0.0
  %vm235 = vcmp.ge.f32.partialorder %v171, 0.0
  %vm236 = vcmp.ge.f32.partialorder %v172, 0.0
  %vm237 = vcmp.ge.f32.partialorder %v173, 0.0
  %vm238 = vcmp.ge.f32.partialorder %v174, 0.0
  %vm239 = vcmp.ge.f32.partialorder %v175, 0.0
  %vm240 = vcmp.ge.f32.partialorder %v176, 0.0
  %vm241 = vcmp.ge.f32.partialorder %v177, 0.0
  %vm242 = vcmp.ge.f32.partialorder %v178, 0.0
  %vm243 = vcmp.ge.f32.partialorder %v179, 0.0
  %vm244 = vcmp.ge.f32.partialorder %v180, 0.0
  %vm245 = vcmp.ge.f32.partialorder %v181, 0.0
  %vm246 = vcmp.ge.f32.partialorder %v182, 0.0
  %vm247 = vcmp.ge.f32.partialorder %v183, 0.0
  %vm248 = vcmp.ge.f32.partialorder %v184, 0.0
  %vm249 = vcmp.ge.f32.partialorder %v185, 0.0
  %vm250 = vcmp.ge.f32.partialorder %v186, 0.0
  %vm251 = vcmp.ge.f32.partialorder %v187, 0.0
  %vm252 = vcmp.ge.f32.partialorder %v188, 0.0
  %vm253 = vcmp.ge.f32.partialorder %v189, 0.0
  %vm254 = vcmp.ge.f32.partialorder %v190, 0.0
  %vm255 = vcmp.ge.f32.partialorder %v191, 0.0
  %vm256 = vcmp.ge.f32.partialorder %v192, 0.0
  %vm257 = vcmp.ge.f32.partialorder %v193, 0.0
  %vm258 = vcmp.ge.f32.partialorder %v194, 0.0
  %vm259 = vcmp.ge.f32.partialorder %v195, 0.0
  %vm260 = vcmp.ge.f32.partialorder %v196, 0.0
  %vm261 = vcmp.ge.f32.partialorder %v197, 0.0
  %vm262 = vcmp.ge.f32.partialorder %v198, 0.0
  %vm263 = vcmp.ge.f32.partialorder %v199, 0.0
  %vm264 = vcmp.ge.f32.partialorder %v200, 0.0
  %vm265 = vcmp.ge.f32.partialorder %v201, 0.0
  %vm266 = vcmp.ge.f32.partialorder %v202, 0.0
  %vm267 = vcmp.ge.f32.partialorder %v203, 0.0
  %vm268 = vcmp.ge.f32.partialorder %v204, 0.0
  %vm269 = vcmp.ge.f32.partialorder %v205, 0.0
  %vm270 = vcmp.ge.f32.partialorder %v206, 0.0
  %vm271 = vcmp.ge.f32.partialorder %v207, 0.0
  %vm272 = vcmp.ge.f32.partialorder %v208, 0.0
  %vm273 = vcmp.ge.f32.partialorder %v209, 0.0
  %vm274 = vcmp.ge.f32.partialorder %v210, 0.0
  %vm275 = vcmp.ge.f32.partialorder %v211, 0.0
  %vm276 = vcmp.ge.f32.partialorder %v212, 0.0
  %vm277 = vcmp.ge.f32.partialorder %v213, 0.0
  %vm278 = vcmp.ge.f32.partialorder %v214, 0.0
  %vm279 = vcmp.ge.f32.partialorder %v215, 0.0
  %vm280 = vcmp.ge.f32.partialorder %v216, 0.0
  %vm281 = vcmp.ge.f32.partialorder %v217, 0.0
  %vm282 = vcmp.ge.f32.partialorder %v218, 0.0
  %vm283 = vcmp.ge.f32.partialorder %v219, 0.0
  %v284 = vmul.f32 %v156, 0.1
  %v285 = vmul.f32 %v157, 0.1
  %v286 = vmul.f32 %v158, 0.1
  %v287 = vmul.f32 %v159, 0.1
  %v288 = vmul.f32 %v160, 0.1
  %v289 = vmul.f32 %v161, 0.1
  %v290 = vmul.f32 %v162, 0.1
  %v291 = vmul.f32 %v163, 0.1
  %v292 = vmul.f32 %v164, 0.1
  %v293 = vmul.f32 %v165, 0.1
  %v294 = vmul.f32 %v166, 0.1
  %v295 = vmul.f32 %v167, 0.1
  %v296 = vmul.f32 %v168, 0.1
  %v297 = vmul.f32 %v169, 0.1
  %v298 = vmul.f32 %v170, 0.1
  %v299 = vmul.f32 %v171, 0.1
  %v300 = vmul.f32 %v172, 0.1
  %v301 = vmul.f32 %v173, 0.1
  %v302 = vmul.f32 %v174, 0.1
  %v303 = vmul.f32 %v175, 0.1
  %v304 = vmul.f32 %v176, 0.1
  %v305 = vmul.f32 %v177, 0.1
  %v306 = vmul.f32 %v178, 0.1
  %v307 = vmul.f32 %v179, 0.1
  %v308 = vmul.f32 %v180, 0.1
  %v309 = vmul.f32 %v181, 0.1
  %v310 = vmul.f32 %v182, 0.1
  %v311 = vmul.f32 %v183, 0.1
  %v312 = vmul.f32 %v184, 0.1
  %v313 = vmul.f32 %v185, 0.1
  %v314 = vmul.f32 %v186, 0.1
  %v315 = vmul.f32 %v187, 0.1
  %v316 = vmul.f32 %v188, 0.1
  %v317 = vmul.f32 %v189, 0.1
  %v318 = vmul.f32 %v190, 0.1
  %v319 = vmul.f32 %v191, 0.1
  %v320 = vmul.f32 %v192, 0.1
  %v321 = vmul.f32 %v193, 0.1
  %v322 = vmul.f32 %v194, 0.1
  %v323 = vmul.f32 %v195, 0.1
  %v324 = vmul.f32 %v196, 0.1
  %v325 = vmul.f32 %v197, 0.1
  %v326 = vmul.f32 %v198, 0.1
  %v327 = vmul.f32 %v199, 0.1
  %v328 = vmul.f32 %v200, 0.1
  %v329 = vmul.f32 %v201, 0.1
  %v330 = vmul.f32 %v202, 0.1
  %v331 = vmul.f32 %v203, 0.1
  %v332 = vmul.f32 %v204, 0.1
  %v333 = vmul.f32 %v205, 0.1
  %v334 = vmul.f32 %v206, 0.1
  %v335 = vmul.f32 %v207, 0.1
  %v336 = vmul.f32 %v208, 0.1
  %v337 = vmul.f32 %v209, 0.1
  %v338 = vmul.f32 %v210, 0.1
  %v339 = vmul.f32 %v211, 0.1
  %v340 = vmul.f32 %v212, 0.1
  %v341 = vmul.f32 %v213, 0.1
  %v342 = vmul.f32 %v214, 0.1
  %v343 = vmul.f32 %v215, 0.1
  %v344 = vmul.f32 %v216, 0.1
  %v345 = vmul.f32 %v217, 0.1
  %v346 = vmul.f32 %v218, 0.1
  %v347 = vmul.f32 %v219, 0.1
  %v348 = vsel %vm220, %v156, %v284
  %v349 = vsel %vm221, %v157, %v285
  %v350 = vsel %vm222, %v158, %v286
  %v351 = vsel %vm223, %v159, %v287
  %v352 = vsel %vm224, %v160, %v288
  %v353 = vsel %vm225, %v161, %v289
  %v354 = vsel %vm226, %v162, %v290
  %v355 = vsel %vm227, %v163, %v291
  %v356 = vsel %vm228, %v164, %v292
  %v357 = vsel %vm229, %v165, %v293
  %v358 = vsel %vm230, %v166, %v294
  %v359 = vsel %vm231, %v167, %v295
  %v360 = vsel %vm232, %v168, %v296
  %v361 = vsel %vm233, %v169, %v297
  %v362 = vsel %vm234, %v170, %v298
  %v363 = vsel %vm235, %v171, %v299
  %v364 = vsel %vm236, %v172, %v300
  %v365 = vsel %vm237, %v173, %v301
  %v366 = vsel %vm238, %v174, %v302
  %v367 = vsel %vm239, %v175, %v303
  %v368 = vsel %vm240, %v176, %v304
  %v369 = vsel %vm241, %v177, %v305
  %v370 = vsel %vm242, %v178, %v306
  %v371 = vsel %vm243, %v179, %v307
  %v372 = vsel %vm244, %v180, %v308
  %v373 = vsel %vm245, %v181, %v309
  %v374 = vsel %vm246, %v182, %v310
  %v375 = vsel %vm247, %v183, %v311
  %v376 = vsel %vm248, %v184, %v312
  %v377 = vsel %vm249, %v185, %v313
  %v378 = vsel %vm250, %v186, %v314
  %v379 = vsel %vm251, %v187, %v315
  %v380 = vsel %vm252, %v188, %v316
  %v381 = vsel %vm253, %v189, %v317
  %v382 = vsel %vm254, %v190, %v318
  %v383 = vsel %vm255, %v191, %v319
  %v384 = vsel %vm256, %v192, %v320
  %v385 = vsel %vm257, %v193, %v321
  %v386 = vsel %vm258, %v194, %v322
  %v387 = vsel %vm259, %v195, %v323
  %v388 = vsel %vm260, %v196, %v324
  %v389 = vsel %vm261, %v197, %v325
  %v390 = vsel %vm262, %v198, %v326
  %v391 = vsel %vm263, %v199, %v327
  %v392 = vsel %vm264, %v200, %v328
  %v393 = vsel %vm265, %v201, %v329
  %v394 = vsel %vm266, %v202, %v330
  %v395 = vsel %vm267, %v203, %v331
  %v396 = vsel %vm268, %v204, %v332
  %v397 = vsel %vm269, %v205, %v333
  %v398 = vsel %vm270, %v206, %v334
  %v399 = vsel %vm271, %v207, %v335
  %v400 = vsel %vm272, %v208, %v336
  %v401 = vsel %vm273, %v209, %v337
  %v402 = vsel %vm274, %v210, %v338
  %v403 = vsel %vm275, %v211, %v339
  %v404 = vsel %vm276, %v212, %v340
  %v405 = vsel %vm277, %v213, %v341
  %v406 = vsel %vm278, %v214, %v342
  %v407 = vsel %vm279, %v215, %v343
  %v408 = vsel %vm280, %v216, %v344
  %v409 = vsel %vm281, %v217, %v345
  %v410 = vsel %vm282, %v218, %v346
  %v411 = vsel %vm283, %v219, %v347
  %v412 = vpack.c.bf16 %v349, %v348
  %v413 = vpack.c.bf16 %v351, %v350
  %v414 = vpack.c.bf16 %v353, %v352
  %v415 = vpack.c.bf16 %v355, %v354
  %v416 = vpack.c.bf16 %v357, %v356
  %v417 = vpack.c.bf16 %v359, %v358
  %v418 = vpack.c.bf16 %v361, %v360
  %v419 = vpack.c.bf16 %v363, %v362
  %v420 = vpack.c.bf16 %v365, %v364
  %v421 = vpack.c.bf16 %v367, %v366
  %v422 = vpack.c.bf16 %v369, %v368
  %v423 = vpack.c.bf16 %v371, %v370
  %v424 = vpack.c.bf16 %v373, %v372
  %v425 = vpack.c.bf16 %v375, %v374
  %v426 = vpack.c.bf16 %v377, %v376
  %v427 = vpack.c.bf16 %v379, %v378
  %v428 = vpack.c.bf16 %v381, %v380
  %v429 = vpack.c.bf16 %v383, %v382
  %v430 = vpack.c.bf16 %v385, %v384
  %v431 = vpack.c.bf16 %v387, %v386
  %v432 = vpack.c.bf16 %v389, %v388
  %v433 = vpack.c.bf16 %v391, %v390
  %v434 = vpack.c.bf16 %v393, %v392
  %v435 = vpack.c.bf16 %v395, %v394
  %v436 = vpack.c.bf16 %v397, %v396
  %v437 = vpack.c.bf16 %v399, %v398
  %v438 = vpack.c.bf16 %v401, %v400
  %v439 = vpack.c.bf16 %v403, %v402
  %v440 = vpack.c.bf16 %v405, %v404
  %v441 = vpack.c.bf16 %v407, %v406
  %v442 = vpack.c.bf16 %v409, %v408
  %v443 = vpack.c.bf16 %v411, %v410
  %v476 = vunpack.c.l.b16 %v412
  %v477 = vunpack.c.h.b16 %v412
  %v478 = vunpack.c.l.b16 %v413
  %v479 = vunpack.c.h.b16 %v413
  %v480 = vunpack.c.l.b16 %v414
  %v481 = vunpack.c.h.b16 %v414
  %v482 = vunpack.c.l.b16 %v415
  %v483 = vunpack.c.h.b16 %v415
  %v484 = vunpack.c.l.b16 %v416
  %v485 = vunpack.c.h.b16 %v416
  %v486 = vunpack.c.l.b16 %v417
  %v487 = vunpack.c.h.b16 %v417
  %v488 = vunpack.c.l.b16 %v418
  %v489 = vunpack.c.h.b16 %v418
  %v490 = vunpack.c.l.b16 %v419
  %v491 = vunpack.c.h.b16 %v419
  %v492 = vunpack.c.l.b16 %v420
  %v493 = vunpack.c.h.b16 %v420
  %v494 = vunpack.c.l.b16 %v421
  %v495 = vunpack.c.h.b16 %v421
  %v496 = vunpack.c.l.b16 %v422
  %v497 = vunpack.c.h.b16 %v422
  %v498 = vunpack.c.l.b16 %v423
  %v499 = vunpack.c.h.b16 %v423
  %v500 = vunpack.c.l.b16 %v424
  %v501 = vunpack.c.h.b16 %v424
  %v502 = vunpack.c.l.b16 %v425
  %v503 = vunpack.c.h.b16 %v425
  %v504 = vunpack.c.l.b16 %v426
  %v505 = vunpack.c.h.b16 %v426
  %v506 = vunpack.c.l.b16 %v427
  %v507 = vunpack.c.h.b16 %v427
  %v508 = vunpack.c.l.b16 %v428
  %v509 = vunpack.c.h.b16 %v428
  %v510 = vunpack.c.l.b16 %v429
  %v511 = vunpack.c.h.b16 %v429
  %v512 = vunpack.c.l.b16 %v430
  %v513 = vunpack.c.h.b16 %v430
  %v514 = vunpack.c.l.b16 %v431
  %v515 = vunpack.c.h.b16 %v431
  %v516 = vunpack.c.l.b16 %v432
  %v517 = vunpack.c.h.b16 %v432
  %v518 = vunpack.c.l.b16 %v433
  %v519 = vunpack.c.h.b16 %v433
  %v520 = vunpack.c.l.b16 %v434
  %v521 = vunpack.c.h.b16 %v434
  %v522 = vunpack.c.l.b16 %v435
  %v523 = vunpack.c.h.b16 %v435
  %v524 = vunpack.c.l.b16 %v436
  %v525 = vunpack.c.h.b16 %v436
  %v526 = vunpack.c.l.b16 %v437
  %v527 = vunpack.c.h.b16 %v437
  %v528 = vunpack.c.l.b16 %v438
  %v529 = vunpack.c.h.b16 %v438
  %v530 = vunpack.c.l.b16 %v439
  %v531 = vunpack.c.h.b16 %v439
  %v532 = vunpack.c.l.b16 %v440
  %v533 = vunpack.c.h.b16 %v440
  %v534 = vunpack.c.l.b16 %v441
  %v535 = vunpack.c.h.b16 %v441
  %v536 = vunpack.c.l.b16 %v442
  %v537 = vunpack.c.h.b16 %v442
  %v538 = vunpack.c.l.b16 %v443
  %v539 = vunpack.c.h.b16 %v443
  %v540 = vpack.c.b16 %v476, %v476
  %v541 = vpack.c.b16 %v477, %v477
  %v542 = vpack.c.b16 %v478, %v478
  %v543 = vpack.c.b16 %v479, %v479
  %v544 = vpack.c.b16 %v480, %v480
  %v545 = vpack.c.b16 %v481, %v481
  %v546 = vpack.c.b16 %v482, %v482
  %v547 = vpack.c.b16 %v483, %v483
  %v548 = vpack.c.b16 %v484, %v484
  %v549 = vpack.c.b16 %v485, %v485
  %v550 = vpack.c.b16 %v486, %v486
  %v551 = vpack.c.b16 %v487, %v487
  %v552 = vpack.c.b16 %v488, %v488
  %v553 = vpack.c.b16 %v489, %v489
  %v554 = vpack.c.b16 %v490, %v490
  %v555 = vpack.c.b16 %v491, %v491
  %v556 = vpack.c.b16 %v492, %v492
  %v557 = vpack.c.b16 %v493, %v493
  %v558 = vpack.c.b16 %v494, %v494
  %v559 = vpack.c.b16 %v495, %v495
  %v560 = vpack.c.b16 %v496, %v496
  %v561 = vpack.c.b16 %v497, %v497
  %v562 = vpack.c.b16 %v498, %v498
  %v563 = vpack.c.b16 %v499, %v499
  %v564 = vpack.c.b16 %v500, %v500
  %v565 = vpack.c.b16 %v501, %v501
  %v566 = vpack.c.b16 %v502, %v502
  %v567 = vpack.c.b16 %v503, %v503
  %v568 = vpack.c.b16 %v504, %v504
  %v569 = vpack.c.b16 %v505, %v505
  %v570 = vpack.c.b16 %v506, %v506
  %v571 = vpack.c.b16 %v507, %v507
  %v572 = vpack.c.b16 %v508, %v508
  %v573 = vpack.c.b16 %v509, %v509
  %v574 = vpack.c.b16 %v510, %v510
  %v575 = vpack.c.b16 %v511, %v511
  %v576 = vpack.c.b16 %v512, %v512
  %v577 = vpack.c.b16 %v513, %v513
  %v578 = vpack.c.b16 %v514, %v514
  %v579 = vpack.c.b16 %v515, %v515
  %v580 = vpack.c.b16 %v516, %v516
  %v581 = vpack.c.b16 %v517, %v517
  %v582 = vpack.c.b16 %v518, %v518
  %v583 = vpack.c.b16 %v519, %v519
  %v584 = vpack.c.b16 %v520, %v520
  %v585 = vpack.c.b16 %v521, %v521
  %v586 = vpack.c.b16 %v522, %v522
  %v587 = vpack.c.b16 %v523, %v523
  %v588 = vpack.c.b16 %v524, %v524
  %v589 = vpack.c.b16 %v525, %v525
  %v590 = vpack.c.b16 %v526, %v526
  %v591 = vpack.c.b16 %v527, %v527
  %v592 = vpack.c.b16 %v528, %v528
  %v593 = vpack.c.b16 %v529, %v529
  %v594 = vpack.c.b16 %v530, %v530
  %v595 = vpack.c.b16 %v531, %v531
  %v596 = vpack.c.b16 %v532, %v532
  %v597 = vpack.c.b16 %v533, %v533
  %v598 = vpack.c.b16 %v534, %v534
  %v599 = vpack.c.b16 %v535, %v535
  %v600 = vpack.c.b16 %v536, %v536
  %v601 = vpack.c.b16 %v537, %v537
  %v602 = vpack.c.b16 %v538, %v538
  %v603 = vpack.c.b16 %v539, %v539
  %668 = vst [vmem:[%s3] sm:$0xf] %v540
  %669 = vst [vmem:[%s3 + $0x4] sm:$0xf] %v541
  %670 = vst [vmem:[%s3 + $0x8] sm:$0xf] %v542
  %671 = vst [vmem:[%s3 + $0xc] sm:$0xf] %v543
  %672 = vst [vmem:[%s3 + $0x10] sm:$0xf] %v544
  %673 = vst [vmem:[%s3 + $0x14] sm:$0xf] %v545
  %674 = vst [vmem:[%s3 + $0x18] sm:$0xf] %v546
  %675 = vst [vmem:[%s3 + $0x1c] sm:$0xf] %v547
  %676 = vst [vmem:[%s3 + $0x20] sm:$0xf] %v548
  %677 = vst [vmem:[%s3 + $0x24] sm:$0xf] %v549
  %678 = vst [vmem:[%s3 + $0x28] sm:$0xf] %v550
  %679 = vst [vmem:[%s3 + $0x2c] sm:$0xf] %v551
  %680 = vst [vmem:[%s3 + $0x30] sm:$0xf] %v552
  %681 = vst [vmem:[%s3 + $0x34] sm:$0xf] %v553
  %682 = vst [vmem:[%s3 + $0x38] sm:$0xf] %v554
  %683 = vst [vmem:[%s3 + $0x3c] sm:$0xf] %v555
  %684 = vst [vmem:[%s3 + $0x40] sm:$0xf] %v556
  %685 = vst [vmem:[%s3 + $0x44] sm:$0xf] %v557
  %686 = vst [vmem:[%s3 + $0x48] sm:$0xf] %v558
  %687 = vst [vmem:[%s3 + $0x4c] sm:$0xf] %v559
  %688 = vst [vmem:[%s3 + $0x50] sm:$0xf] %v560
  %689 = vst [vmem:[%s3 + $0x54] sm:$0xf] %v561
  %690 = vst [vmem:[%s3 + $0x58] sm:$0xf] %v562
  %691 = vst [vmem:[%s3 + $0x5c] sm:$0xf] %v563
  %692 = vst [vmem:[%s3 + $0x60] sm:$0xf] %v564
  %693 = vst [vmem:[%s3 + $0x64] sm:$0xf] %v565
  %694 = vst [vmem:[%s3 + $0x68] sm:$0xf] %v566
  %695 = vst [vmem:[%s3 + $0x6c] sm:$0xf] %v567
  %696 = vst [vmem:[%s3 + $0x70] sm:$0xf] %v568
  %697 = vst [vmem:[%s3 + $0x74] sm:$0xf] %v569
  %698 = vst [vmem:[%s3 + $0x78] sm:$0xf] %v570
  %699 = vst [vmem:[%s3 + $0x7c] sm:$0xf] %v571
  %700 = vst [vmem:[%s3 + $0x80] sm:$0xf] %v572
  %701 = vst [vmem:[%s3 + $0x84] sm:$0xf] %v573
  %702 = vst [vmem:[%s3 + $0x88] sm:$0xf] %v574
  %703 = vst [vmem:[%s3 + $0x8c] sm:$0xf] %v575
  %704 = vst [vmem:[%s3 + $0x90] sm:$0xf] %v576
  %705 = vst [vmem:[%s3 + $0x94] sm:$0xf] %v577
  %706 = vst [vmem:[%s3 + $0x98] sm:$0xf] %v578
  %707 = vst [vmem:[%s3 + $0x9c] sm:$0xf] %v579
  %708 = vst [vmem:[%s3 + $0xa0] sm:$0xf] %v580
  %709 = vst [vmem:[%s3 + $0xa4] sm:$0xf] %v581
  %710 = vst [vmem:[%s3 + $0xa8] sm:$0xf] %v582
  %711 = vst [vmem:[%s3 + $0xac] sm:$0xf] %v583
  %712 = vst [vmem:[%s3 + $0xb0] sm:$0xf] %v584
  %713 = vst [vmem:[%s3 + $0xb4] sm:$0xf] %v585
  %714 = vst [vmem:[%s3 + $0xb8] sm:$0xf] %v586
  %715 = vst [vmem:[%s3 + $0xbc] sm:$0xf] %v587
  %716 = vst [vmem:[%s3 + $0xc0] sm:$0xf] %v588
  %717 = vst [vmem:[%s3 + $0xc4] sm:$0xf] %v589
  %718 = vst [vmem:[%s3 + $0xc8] sm:$0xf] %v590
  %719 = vst [vmem:[%s3 + $0xcc] sm:$0xf] %v591
  %720 = vst [vmem:[%s3 + $0xd0] sm:$0xf] %v592
  %721 = vst [vmem:[%s3 + $0xd4] sm:$0xf] %v593
  %722 = vst [vmem:[%s3 + $0xd8] sm:$0xf] %v594
  %723 = vst [vmem:[%s3 + $0xdc] sm:$0xf] %v595
  %724 = vst [vmem:[%s3 + $0xe0] sm:$0xf] %v596
  %725 = vst [vmem:[%s3 + $0xe4] sm:$0xf] %v597
  %726 = vst [vmem:[%s3 + $0xe8] sm:$0xf] %v598
  %727 = vst [vmem:[%s3 + $0xec] sm:$0xf] %v599
  %728 = vst [vmem:[%s3 + $0xf0] sm:$0xf] %v600
  %729 = vst [vmem:[%s3 + $0xf4] sm:$0xf] %v601
  %730 = vst [vmem:[%s3 + $0xf8] sm:$0xf] %v602
  %731 = vst [vmem:[%s3 + $0xfc] sm:$0xf] %v603
  // Predicated region
  $region14: #{conv_bn_leakyrelu_nhwc.3} parent=0 // pred_check
    _
  $region15: #{conv_bn_leakyrelu_nhwc.3} parent=0 // pred_check_branch
    %733 = sbr.rel (0) target = $region17
  $region16: #{conv_bn_leakyrelu_nhwc.3} parent=0 // pred_region
    _
  $region17: #{conv_bn_leakyrelu_nhwc.3} parent=0 // pred_fallthru
    _
  // Predicated region
  $region18: #{conv_bn_leakyrelu_nhwc.3} parent=0 // pred_check
    _
  $region19: #{conv_bn_leakyrelu_nhwc.3} parent=0 // pred_check_branch
    %735 = sbr.rel (0) target = $region21
  $region20: #{conv_bn_leakyrelu_nhwc.3} parent=0 // pred_region
    _
  $region21: #{conv_bn_leakyrelu_nhwc.3} parent=0 // pred_fallthru
    _

</llo_original>
